<compile_context>
chip_gen: v6e
topology: v6e:2x2x1
jax: 0.10.0
libtpu: 0.0.40
codegen_flags: <defaults>
</compile_context>

<pallas_src>
import jax
import jax.numpy as jnp
from jax import lax
from jax.experimental import pallas as pl
from jax.experimental.pallas import tpu as pltpu


def _fused_kernel(gate_ref, x_ref, w_ref, gamma_ref, beta_ref, o_ref):
    # gate_ref : [1,  C_in]  f32   pre-sigmoid SE logits
    # x_ref    : [C_in, HW]  bf16  activations, channel-major
    # w_ref    : [Cb, C_in]  bf16  1x1-conv weight slab ([C_out, C_in] layout)
    # gamma_ref: [Cb, 1]     f32
    # beta_ref : [Cb, 1]     f32
    # o_ref    : [Cb, HW]    f32
    eps = jnp.float32(1e-3)

    # Fold the SE sigmoid gate into the weight (one pass over [Cb, C_in])
    # instead of an elementwise pass over the full [C_in, HW] activation.
    gate = jax.nn.sigmoid(gate_ref[...])                                     # [1, C_in]
    w_scaled = (w_ref[...].astype(jnp.float32) * gate).astype(jnp.bfloat16)  # [Cb, C_in]

    # 1x1 conv == MXU matmul: bf16 operands, f32 accumulate.
    y = jnp.dot(w_scaled, x_ref[...], preferred_element_type=jnp.float32)    # [Cb, HW]

    # BatchNorm2d (training mode, N=1): biased batch stats over HW (lane axis).
    hw = y.shape[1]
    inv_hw = jnp.float32(1.0 / hw)
    mean = jnp.sum(y, axis=1, keepdims=True) * inv_hw                        # [Cb, 1]
    centered = y - mean
    var = jnp.sum(centered * centered, axis=1, keepdims=True) * inv_hw       # [Cb, 1]
    inv_std = lax.rsqrt(var + eps)                                           # EUP

    # Affine fold: out = (y - mean) * inv_std * gamma + beta = y*a + b
    a = gamma_ref[...] * inv_std
    b = beta_ref[...] - mean * a
    o_ref[...] = y * a + b


def fused_sigmoid_mul_conv_bn(x_nchw, gate_nc11, weight_oi, gamma, beta):
    """x_nchw: [1, C_in, H, W]; gate_nc11: [1, C_in, 1, 1];
       weight_oi: [C_out, C_in] (1x1 conv weight squeezed);
       gamma, beta: [C_out]. Returns [1, C_out, H, W] float32."""
    n, c_in, h, w = x_nchw.shape
    assert n == 1
    c_out = weight_oi.shape[0]
    hw = h * w

    # Channel-major layouts: pure reshapes, no wrapper transposes.
    x_mat = x_nchw.reshape(c_in, hw).astype(jnp.bfloat16)       # [C_in, HW]
    gate_mat = gate_nc11.reshape(1, c_in).astype(jnp.float32)   # [1, C_in]
    w_mat = weight_oi.astype(jnp.bfloat16)                      # [C_out, C_in]
    gamma_mat = gamma.reshape(c_out, 1).astype(jnp.float32)
    beta_mat = beta.reshape(c_out, 1).astype(jnp.float32)

    # Split output channels across the grid: per-channel BN stats mean there is
    # no cross-step reduction; "parallel" lets v7x use both TensorCores.
    n_split = 2 if (c_out % 2 == 0 and (c_out // 2) % 8 == 0) else 1
    c_blk = c_out // n_split

    out_mat = pl.pallas_call(
        _fused_kernel,
        out_shape=jax.ShapeDtypeStruct((c_out, hw), jnp.float32),
        grid=(n_split,),
        in_specs=[
            pl.BlockSpec((1, c_in), lambda i: (0, 0)),        # gate (shared)
            pl.BlockSpec((c_in, hw), lambda i: (0, 0)),       # X (shared)
            pl.BlockSpec((c_blk, c_in), lambda i: (i, 0)),    # weight slab
            pl.BlockSpec((c_blk, 1), lambda i: (i, 0)),       # gamma slab
            pl.BlockSpec((c_blk, 1), lambda i: (i, 0)),       # beta slab
        ],
        out_specs=pl.BlockSpec((c_blk, hw), lambda i: (i, 0)),
        compiler_params=pltpu.CompilerParams(
            dimension_semantics=("parallel",)),
    )(gate_mat, x_mat, w_mat, gamma_mat, beta_mat)

    # [C_out, HW] -> NCHW is a pure reshape (no transpose needed).
    return out_mat.reshape(1, c_out, h, w)


if __name__ == "__main__":
    # Shapes implied by the module's forward pass.
    C_IN, C_OUT, H, W = 1056, 176, 14, 14

    key = jax.random.PRNGKey(0)
    k_x, k_g, k_w = jax.random.split(key, 3)

    x390 = jax.random.normal(k_x, (1, C_IN, H, W), dtype=jnp.float32)
    x394 = jax.random.normal(k_g, (1, C_IN, 1, 1), dtype=jnp.float32)

    # Deterministic synthetic parameters (not a checkpoint load).
    conv_w = jax.random.normal(k_w, (C_OUT, C_IN), dtype=jnp.float32) * 0.02
    bn_gamma = jnp.ones((C_OUT,), dtype=jnp.float32)
    bn_beta = jnp.zeros((C_OUT,), dtype=jnp.float32)

    out = fused_sigmoid_mul_conv_bn(x390, x394, conv_w, bn_gamma, bn_beta)
    out = jax.block_until_ready(out)
    assert out.shape == (1, C_OUT, H, W)

    # f32 reference (loose tolerance: matmul operands are bf16 in the kernel).
    def ref(x, g, wgt, gamma, beta):
        xg = jax.nn.sigmoid(g) * x                                   # [1,C_in,H,W]
        y = jnp.einsum("oc,chw->ohw", wgt, xg[0],
                       precision=lax.Precision.HIGHEST)[None]        # [1,C_out,H,W]
        mean = jnp.mean(y, axis=(0, 2, 3), keepdims=True)
        var = jnp.mean((y - mean) ** 2, axis=(0, 2, 3), keepdims=True)
        return (y - mean) * lax.rsqrt(var + 1e-3) * gamma[None, :, None, None] \
            + beta[None, :, None, None]

    expected = ref(x390, x394, conv_w, bn_gamma, bn_beta)
    max_err = float(jnp.max(jnp.abs(out - expected)))
    assert max_err < 0.15, f"max abs error too large: {max_err}"
    print("KERNEL_OK")
</pallas_src>

<mosaic_0001>
module attributes {stable_mosaic.version = 11 : i64} {
  func.func @_fused_kernel(%arg0: i32, %arg1: memref<1x1056xf32, #tpu.memory_space<vmem>>, %arg2: memref<1056x196xbf16, #tpu.memory_space<vmem>>, %arg3: memref<88x1056xbf16, #tpu.memory_space<vmem>>, %arg4: memref<88x1xf32, #tpu.memory_space<vmem>>, %arg5: memref<88x1xf32, #tpu.memory_space<vmem>>, %arg6: memref<88x196xf32, #tpu.memory_space<vmem>>) attributes {dimension_semantics = [#tpu.dimension_semantics<parallel>], iteration_bounds = array<i64: 2>, scalar_prefetch = 0 : i64, scratch_operands = 0 : i64, tpu.core_type = #tpu.core_type<tc>, window_params = [{pipeline_mode = #tpu.pipeline_mode<synchronous>, transform_indices = @transform_0, window_bounds = array<i64: 1, 1056>}, {pipeline_mode = #tpu.pipeline_mode<synchronous>, transform_indices = @transform_1, window_bounds = array<i64: 1056, 196>}, {transform_indices = @transform_2, window_bounds = array<i64: 88, 1056>}, {transform_indices = @transform_3, window_bounds = array<i64: 88, 1>}, {transform_indices = @transform_4, window_bounds = array<i64: 88, 1>}, {transform_indices = @transform_5, window_bounds = array<i64: 88, 196>}]} {
    %c0 = arith.constant 0 : index
    %c0_0 = arith.constant 0 : index
    %0 = vector.load %arg1[%c0, %c0_0] : memref<1x1056xf32, #tpu.memory_space<vmem>>, vector<1x1056xf32>
    %1 = arith.negf %0 : vector<1x1056xf32>
    %2 = math.exp %1 : vector<1x1056xf32>
    %cst = arith.constant 1.000000e+00 : f32
    %3 = vector.broadcast %cst : f32 to vector<1x1056xf32>
    %4 = arith.addf %3, %2 : vector<1x1056xf32>
    %5 = arith.divf %3, %4 : vector<1x1056xf32>
    %c0_1 = arith.constant 0 : index
    %c0_2 = arith.constant 0 : index
    %6 = vector.load %arg3[%c0_1, %c0_2] : memref<88x1056xbf16, #tpu.memory_space<vmem>>, vector<88x1056xbf16>
    %7 = arith.extf %6 : vector<88x1056xbf16> to vector<88x1056xf32>
    %8 = vector.broadcast %5 : vector<1x1056xf32> to vector<88x1056xf32>
    %9 = arith.mulf %7, %8 : vector<88x1056xf32>
    %10 = arith.truncf %9 : vector<88x1056xf32> to vector<88x1056xbf16>
    %c0_3 = arith.constant 0 : index
    %c0_4 = arith.constant 0 : index
    %11 = vector.load %arg2[%c0_3, %c0_4] : memref<1056x196xbf16, #tpu.memory_space<vmem>>, vector<1056x196xbf16>
    %cst_5 = arith.constant dense<0.000000e+00> : vector<88x196xf32>
    %12 = tpu.matmul %10, %11, %cst_5 {dimension_numbers = #tpu.dot_dimension_numbers<[1], [0], [0], [1], [0, 0, 1, 1], [], []>} : vector<88x1056xbf16>, vector<1056x196xbf16>, vector<88x196xf32> -> vector<88x196xf32>
    %cst_6 = arith.constant dense<0.000000e+00> : vector<88xf32>
    %13 = vector.multi_reduction <add>, %12, %cst_6 [1] : vector<88x196xf32> to vector<88xf32>
    %14 = vector.shape_cast %13 : vector<88xf32> to vector<88x1xf32>
    %cst_7 = arith.constant 0.00510204071 : f32
    %15 = vector.broadcast %cst_7 : f32 to vector<88x1xf32>
    %16 = arith.mulf %14, %15 : vector<88x1xf32>
    %17 = vector.broadcast %16 : vector<88x1xf32> to vector<88x196xf32>
    %18 = arith.subf %12, %17 : vector<88x196xf32>
    %19 = arith.mulf %18, %18 : vector<88x196xf32>
    %cst_8 = arith.constant dense<0.000000e+00> : vector<88xf32>
    %20 = vector.multi_reduction <add>, %19, %cst_8 [1] : vector<88x196xf32> to vector<88xf32>
    %21 = vector.shape_cast %20 : vector<88xf32> to vector<88x1xf32>
    %cst_9 = arith.constant 0.00510204071 : f32
    %22 = vector.broadcast %cst_9 : f32 to vector<88x1xf32>
    %23 = arith.mulf %21, %22 : vector<88x1xf32>
    %cst_10 = arith.constant 1.000000e-03 : f32
    %24 = vector.broadcast %cst_10 : f32 to vector<88x1xf32>
    %25 = arith.addf %23, %24 : vector<88x1xf32>
    %26 = math.rsqrt %25 : vector<88x1xf32>
    %c0_11 = arith.constant 0 : index
    %c0_12 = arith.constant 0 : index
    %27 = vector.load %arg4[%c0_11, %c0_12] : memref<88x1xf32, #tpu.memory_space<vmem>>, vector<88x1xf32>
    %28 = arith.mulf %27, %26 : vector<88x1xf32>
    %c0_13 = arith.constant 0 : index
    %c0_14 = arith.constant 0 : index
    %29 = vector.load %arg5[%c0_13, %c0_14] : memref<88x1xf32, #tpu.memory_space<vmem>>, vector<88x1xf32>
    %30 = arith.mulf %16, %28 : vector<88x1xf32>
    %31 = arith.subf %29, %30 : vector<88x1xf32>
    %32 = vector.broadcast %28 : vector<88x1xf32> to vector<88x196xf32>
    %33 = arith.mulf %12, %32 : vector<88x196xf32>
    %34 = vector.broadcast %31 : vector<88x1xf32> to vector<88x196xf32>
    %35 = arith.addf %33, %34 : vector<88x196xf32>
    %c0_15 = arith.constant 0 : index
    %c0_16 = arith.constant 0 : index
    %36 = vector.load %arg6[%c0_15, %c0_16] : memref<88x196xf32, #tpu.memory_space<vmem>>, vector<88x196xf32>
    tpu.vector_store %arg6[%c0_15, %c0_16], %35 {strides = array<i32>} : memref<88x196xf32, #tpu.memory_space<vmem>>, vector<88x196xf32>,
    return
  }
  func.func @transform_0(%arg0: i32) -> (i32, i32) {
    %c0_i32 = arith.constant 0 : i32
    %c0_i32_0 = arith.constant 0 : i32
    %c0_i32_1 = arith.constant 0 : i32
    return %c0_i32, %c0_i32_0 : i32, i32
  }
  func.func @transform_1(%arg0: i32) -> (i32, i32) {
    %c0_i32 = arith.constant 0 : i32
    %c0_i32_0 = arith.constant 0 : i32
    %c0_i32_1 = arith.constant 0 : i32
    return %c0_i32, %c0_i32_0 : i32, i32
  }
  func.func @transform_2(%arg0: i32) -> (i32, i32) {
    %c0_i32 = arith.constant 0 : i32
    %c0_i32_0 = arith.constant 0 : i32
    return %arg0, %c0_i32 : i32, i32
  }
  func.func @transform_3(%arg0: i32) -> (i32, i32) {
    %c0_i32 = arith.constant 0 : i32
    %c0_i32_0 = arith.constant 0 : i32
    return %arg0, %c0_i32 : i32, i32
  }
  func.func @transform_4(%arg0: i32) -> (i32, i32) {
    %c0_i32 = arith.constant 0 : i32
    %c0_i32_0 = arith.constant 0 : i32
    return %arg0, %c0_i32 : i32, i32
  }
  func.func @transform_5(%arg0: i32) -> (i32, i32) {
    %c0_i32 = arith.constant 0 : i32
    %c0_i32_0 = arith.constant 0 : i32
    return %arg0, %c0_i32 : i32, i32
  }
}

</mosaic_0001>

<llo_original>
// kernel: tpu_custom_call.1
$region0: #{tpu_custom_call.1}
  #allocation0 [shape = 'u32[]', space=smem, size = 0x4, offset = 0x4, fixed_abs, tag = 'smem constant byte address 0x4 - core index']
  #allocation1 [shape = 'u32[144,128]{1,0:T(1,128)}', space=vmem, size = 0x12000, scoped, tag = 'internal scratch']
  %s0 = inlined_call_operand.vmem [shape: f32[1,1056], index: 0, kind: input, shape index: {}]
  %s1 = inlined_call_operand.vmem [shape: bf16[1056,196], index: 1, kind: input, shape index: {}]
  %s2 = inlined_call_operand.vmem [shape: bf16[176,1056], index: 2, kind: input, shape index: {}]
  %s3 = inlined_call_operand.vmem [shape: f32[176,1], index: 3, kind: input, shape index: {}]
  %s4 = inlined_call_operand.vmem [shape: f32[176,1], index: 4, kind: input, shape index: {}]
  %s5 = inlined_call_operand.hbm [shape: f32[176,196], index: 5, kind: output, shape index: {}]
  %s6 = sld [smem:[#allocation0]]
  $region53: #{tpu_custom_call.1} parent=0
    _
  %s8 = ssub.s32 1, %s6
  %s9 = scalar_select 0, %s8, %s6
  $region1: #{tpu_custom_call.1} parent=0
    #allocation2 [shape = 'u8[180224]{0}', space=vmem, size = 0x2c000, scoped, tag = 'output window, operand 0']
    #allocation3 [shape = 's32[2]{0}', space=sflag, size = 0x8, scoped, tag = 'scoped memory for tpu_custom_call.1']
    %10 = vsyncpa [#allocation3], 0
    %s11 = scalar_lea.sflag [#allocation3], 1
    %12 = vsyncpa %s11, 0
    loop: start=0, step=1, limit=4
    $region2: #{tpu_custom_call.1} parent=1 // loop_pre_header
      _
    $region3: #{tpu_custom_call.1} parent=1 // loop_header
      %s14 = sphi 0, %s18
      %p15 = scmp.ge.s32.totalorder %s14, 4
      %s22 = sphi 0, %s22
      %s24 = sphi 0, %s22
      %s25 = sphi 0, %s24
      %s39 = sphi 0, %s25
      %s43 = sphi 0, %s43
      %s45 = sphi 0, %s43
      %s46 = sphi 0, %s45
      %s60 = sphi 0, %s46
      %s66 = sphi 0, %s68
      %s69 = sphi 0, %s66
      %s70 = sphi 0, %s69
      %s86 = sphi 0, %s70
      %s92 = sphi 0, %s94
      %s95 = sphi 0, %s92
      %s96 = sphi 0, %s95
      %s112 = sphi 0, %s96
      %s118 = sphi 0, %s120
      %s121 = sphi 0, %s118
      %s122 = sphi 0, %s121
      %s138 = sphi 0, %s122
      %s144 = sphi 0, %s146
      %s147 = sphi 0, %s144
      %s148 = sphi 0, %s147
      %s164 = sphi 0, %s148
    $region4: #{tpu_custom_call.1} parent=1 // loop_header_branch
      %17 = sbr.rel (%p15) target = $region8
    $region5: #{tpu_custom_call.1} parent=1 // loop_body
      %s19 = ssub.s32 %s14, 1
      %s20 = ssub.s32 %s14, 2
      %s21 = sadd.s32 %s14, 1
      %s23 = sadd.s32 %s22, 1
      %p26 = scmp.eq.s32.totalorder %s14, 1
      %p27 = scmp.ne.s32.totalorder %s22, %s24
      %p28 = scmp.eq.s32.totalorder %s14, 0
      %p29 = por %p27, %p28
      %p30 = scmp.ne.s32.totalorder %s22, %s24
      %p31 = scmp.eq.s32.totalorder %s19, 1
      %p32 = por %p30, %p31
      %p33 = scmp.ne.s32.totalorder %s24, %s25
      %p34 = scmp.eq.s32.totalorder %s19, 0
      %p35 = por %p33, %p34
      %p36 = scmp.ne.s32.totalorder %s24, %s25
      %p37 = scmp.eq.s32.totalorder %s20, 1
      %p38 = por %p36, %p37
      %p40 = scmp.ne.s32.totalorder %s25, %s39
      %p41 = scmp.eq.s32.totalorder %s20, 0
      %p42 = por %p40, %p41
      %s44 = sadd.s32 %s43, 1
      %p47 = scmp.eq.s32.totalorder %s14, 1
      %p48 = scmp.ne.s32.totalorder %s43, %s45
      %p49 = scmp.eq.s32.totalorder %s14, 0
      %p50 = por %p48, %p49
      %p51 = scmp.ne.s32.totalorder %s43, %s45
      %p52 = scmp.eq.s32.totalorder %s19, 1
      %p53 = por %p51, %p52
      %p54 = scmp.ne.s32.totalorder %s45, %s46
      %p55 = scmp.eq.s32.totalorder %s19, 0
      %p56 = por %p54, %p55
      %p57 = scmp.ne.s32.totalorder %s45, %s46
      %p58 = scmp.eq.s32.totalorder %s20, 1
      %p59 = por %p57, %p58
      %p61 = scmp.ne.s32.totalorder %s46, %s60
      %p62 = scmp.eq.s32.totalorder %s20, 0
      %p63 = por %p61, %p62
      %s64 = ssub.s32 %s14, %s21
      %p65 = scmp.eq.s32.totalorder %s64, 0
      %s67 = sadd.s32 %s66, 1
      %s68 = scalar_select %p65, %s66, %s67
      %p71 = pneg %p65
      %p72 = scmp.eq.s32.totalorder %s14, 1
      %p73 = por %p71, %p72
      %p74 = scmp.ne.s32.totalorder %s66, %s69
      %p75 = scmp.eq.s32.totalorder %s14, 0
      %p76 = por %p74, %p75
      %p77 = scmp.ne.s32.totalorder %s66, %s69
      %p78 = scmp.eq.s32.totalorder %s19, 1
      %p79 = por %p77, %p78
      %p80 = scmp.ne.s32.totalorder %s69, %s70
      %p81 = scmp.eq.s32.totalorder %s19, 0
      %p82 = por %p80, %p81
      %p83 = scmp.ne.s32.totalorder %s69, %s70
      %p84 = scmp.eq.s32.totalorder %s20, 1
      %p85 = por %p83, %p84
      %p87 = scmp.ne.s32.totalorder %s70, %s86
      %p88 = scmp.eq.s32.totalorder %s20, 0
      %p89 = por %p87, %p88
      %s90 = ssub.s32 %s14, %s21
      %p91 = scmp.eq.s32.totalorder %s90, 0
      %s93 = sadd.s32 %s92, 1
      %s94 = scalar_select %p91, %s92, %s93
      %p97 = pneg %p91
      %p98 = scmp.eq.s32.totalorder %s14, 1
      %p99 = por %p97, %p98
      %p100 = scmp.ne.s32.totalorder %s92, %s95
      %p101 = scmp.eq.s32.totalorder %s14, 0
      %p102 = por %p100, %p101
      %p103 = scmp.ne.s32.totalorder %s92, %s95
      %p104 = scmp.eq.s32.totalorder %s19, 1
      %p105 = por %p103, %p104
      %p106 = scmp.ne.s32.totalorder %s95, %s96
      %p107 = scmp.eq.s32.totalorder %s19, 0
      %p108 = por %p106, %p107
      %p109 = scmp.ne.s32.totalorder %s95, %s96
      %p110 = scmp.eq.s32.totalorder %s20, 1
      %p111 = por %p109, %p110
      %p113 = scmp.ne.s32.totalorder %s96, %s112
      %p114 = scmp.eq.s32.totalorder %s20, 0
      %p115 = por %p113, %p114
      %s116 = ssub.s32 %s14, %s21
      %p117 = scmp.eq.s32.totalorder %s116, 0
      %s119 = sadd.s32 %s118, 1
      %s120 = scalar_select %p117, %s118, %s119
      %p123 = pneg %p117
      %p124 = scmp.eq.s32.totalorder %s14, 1
      %p125 = por %p123, %p124
      %p126 = scmp.ne.s32.totalorder %s118, %s121
      %p127 = scmp.eq.s32.totalorder %s14, 0
      %p128 = por %p126, %p127
      %p129 = scmp.ne.s32.totalorder %s118, %s121
      %p130 = scmp.eq.s32.totalorder %s19, 1
      %p131 = por %p129, %p130
      %p132 = scmp.ne.s32.totalorder %s121, %s122
      %p133 = scmp.eq.s32.totalorder %s19, 0
      %p134 = por %p132, %p133
      %p135 = scmp.ne.s32.totalorder %s121, %s122
      %p136 = scmp.eq.s32.totalorder %s20, 1
      %p137 = por %p135, %p136
      %p139 = scmp.ne.s32.totalorder %s122, %s138
      %p140 = scmp.eq.s32.totalorder %s20, 0
      %p141 = por %p139, %p140
      %s142 = ssub.s32 %s14, %s21
      %p143 = scmp.eq.s32.totalorder %s142, 0
      %s145 = sadd.s32 %s144, 1
      %s146 = scalar_select %p143, %s144, %s145
      %p149 = pneg %p143
      %p150 = scmp.eq.s32.totalorder %s14, 1
      %p151 = por %p149, %p150
      %p152 = scmp.ne.s32.totalorder %s144, %s147
      %p153 = scmp.eq.s32.totalorder %s14, 0
      %p154 = por %p152, %p153
      %p155 = scmp.ne.s32.totalorder %s144, %s147
      %p156 = scmp.eq.s32.totalorder %s19, 1
      %p157 = por %p155, %p156
      %p158 = scmp.ne.s32.totalorder %s147, %s148
      %p159 = scmp.eq.s32.totalorder %s19, 0
      %p160 = por %p158, %p159
      %p161 = scmp.ne.s32.totalorder %s147, %s148
      %p162 = scmp.eq.s32.totalorder %s20, 1
      %p163 = por %p161, %p162
      %p165 = scmp.ne.s32.totalorder %s148, %s164
      %p166 = scmp.eq.s32.totalorder %s20, 0
      %p167 = por %p165, %p166
      %p168 = scmp.le.s32.totalorder 1, %s14
      %p169 = scmp.lt.s32.totalorder %s14, 3
      %p170 = pnand %p168, %p169
      %p171 = pneg %p170
      // Predicated region
      $region9: #{tpu_custom_call.1} parent=5 // pred_check
        _
      $region10: #{tpu_custom_call.1} parent=5 // pred_check_branch
        %173 = sbr.rel (%p170) target = $region12
      $region11: #{tpu_custom_call.1} parent=5 // pred_region
        %s174 = ssub.s32 %s14, 1
        // Predicated region
        $region13: #{tpu_custom_call.1} parent=11 // pred_check
          %p175 = pneg %p35
        $region14: #{tpu_custom_call.1} parent=11 // pred_check_branch
          %177 = sbr.rel (%p175) target = $region16
        $region15: #{tpu_custom_call.1} parent=11 // pred_region
          _
        $region16: #{tpu_custom_call.1} parent=11 // pred_fallthru
          _
        // Predicated region
        $region17: #{tpu_custom_call.1} parent=11 // pred_check
          %p178 = pneg %p56
        $region18: #{tpu_custom_call.1} parent=11 // pred_check_branch
          %180 = sbr.rel (%p178) target = $region20
        $region19: #{tpu_custom_call.1} parent=11 // pred_region
          _
        $region20: #{tpu_custom_call.1} parent=11 // pred_fallthru
          _
      $region12: #{tpu_custom_call.1} parent=5 // pred_fallthru
        _
      %p181 = scmp.lt.s32.totalorder %s14, 2
      // Predicated region
      $region21: #{tpu_custom_call.1} parent=5 // pred_check
        %p182 = pneg %p181
      $region22: #{tpu_custom_call.1} parent=5 // pred_check_branch
        %184 = sbr.rel (%p182) target = $region24
      $region23: #{tpu_custom_call.1} parent=5 // pred_region
        // Predicated region
        $region25: #{tpu_custom_call.1} parent=23 // pred_check
          %p185 = pneg %p76
        $region26: #{tpu_custom_call.1} parent=23 // pred_check_branch
          %187 = sbr.rel (%p185) target = $region28
        $region27: #{tpu_custom_call.1} parent=23 // pred_region
          %s188 = smul.u32 11, %s14
          %p189 = scmp.lt.s32.totalorder %s188, 21
          %s190 = scalar_select %p189, %s188, 21
          %s191 = smul.addr %s190, 9
          %s192 = smul.addr %s191, 4
          %s193 = scalar_lea.vmem %s2, %s192
          %s194 = smul.u32 11, %s14
        $region28: #{tpu_custom_call.1} parent=23 // pred_fallthru
          _
        // Predicated region
        $region29: #{tpu_custom_call.1} parent=23 // pred_check
          %p195 = pneg %p102
        $region30: #{tpu_custom_call.1} parent=23 // pred_check_branch
          %197 = sbr.rel (%p195) target = $region32
        $region31: #{tpu_custom_call.1} parent=23 // pred_region
          %s198 = smul.u32 11, %s14
          %p199 = scmp.lt.s32.totalorder %s198, 21
          %s200 = scalar_select %p199, %s198, 21
          %s201 = smul.addr %s200, 8
          %s202 = scalar_lea.vmem %s3, %s201
          %s203 = smul.u32 11, %s14
        $region32: #{tpu_custom_call.1} parent=23 // pred_fallthru
          _
        // Predicated region
        $region33: #{tpu_custom_call.1} parent=23 // pred_check
          %p204 = pneg %p128
        $region34: #{tpu_custom_call.1} parent=23 // pred_check_branch
          %206 = sbr.rel (%p204) target = $region36
        $region35: #{tpu_custom_call.1} parent=23 // pred_region
          %s207 = smul.u32 11, %s14
          %p208 = scmp.lt.s32.totalorder %s207, 21
          %s209 = scalar_select %p208, %s207, 21
          %s210 = smul.addr %s209, 8
          %s211 = scalar_lea.vmem %s4, %s210
          %s212 = smul.u32 11, %s14
        $region36: #{tpu_custom_call.1} parent=23 // pred_fallthru
          _
      $region24: #{tpu_custom_call.1} parent=5 // pred_fallthru
        _
      %p213 = scmp.le.s32.totalorder 1, %s14
      %p214 = scmp.lt.s32.totalorder %s14, 3
      %p215 = pnand %p213, %p214
      %p216 = pneg %p215
      // Predicated region
      $region37: #{tpu_custom_call.1} parent=5 // pred_check
        _
      $region38: #{tpu_custom_call.1} parent=5 // pred_check_branch
        %218 = sbr.rel (%p215) target = $region40
      $region39: #{tpu_custom_call.1} parent=5 // pred_region
        %s219 = ssub.s32 %s14, 1
        %p220 = pneg %p35
        %p221 = pneg %p32
        %p222 = pneg %p56
        %p223 = pneg %p53
        %s224 = smul.u32 11, %s19
        %p225 = scmp.lt.s32.totalorder %s224, 21
        %s226 = scalar_select %p225, %s224, 21
        %s227 = smul.addr %s226, 9
        %s228 = smul.addr %s227, 4
        %s229 = scalar_lea.vmem %s2, %s228
        %p230 = pneg %p82
        %p231 = pneg %p79
        %s232 = smul.u32 11, %s19
        %p233 = scmp.lt.s32.totalorder %s232, 21
        %s234 = scalar_select %p233, %s232, 21
        %s235 = smul.addr %s234, 8
        %s236 = scalar_lea.vmem %s3, %s235
        %p237 = pneg %p108
        %p238 = pneg %p105
        %s239 = smul.u32 11, %s19
        %p240 = scmp.lt.s32.totalorder %s239, 21
        %s241 = scalar_select %p240, %s239, 21
        %s242 = smul.addr %s241, 8
        %s243 = scalar_lea.vmem %s4, %s242
        %p244 = pneg %p134
        %p245 = pneg %p131
        %p246 = pneg %p160
        %p247 = pneg %p157
        %s248 = sand.u32 %s147, 1
        %s249 = scalar_lea.sflag [#allocation3], %s248
        %s250 = sand.u32 %s147, 1
        %s251 = smul.addr %s250, 176
        %s252 = scalar_lea.vmem [#allocation2], %s251
        %s253 = smul.u32 11, %s19
        %p254 = scmp.lt.s32.totalorder %s253, 21
        %s255 = scalar_select %p254, %s253, 21
        %s256 = smul.addr %s255, 9
        %s257 = smul.addr %s256, 4
        %s258 = scalar_lea.vmem %s2, %s257
        %s259 = smul.u32 11, %s19
        %s260 = smul.u32 11, %s19
        %p261 = scmp.lt.s32.totalorder %s260, 21
        %s262 = scalar_select %p261, %s260, 21
        %s263 = smul.addr %s262, 8
        %s264 = scalar_lea.vmem %s3, %s263
        %s265 = smul.u32 11, %s19
        %s266 = smul.u32 11, %s19
        %p267 = scmp.lt.s32.totalorder %s266, 21
        %s268 = scalar_select %p267, %s266, 21
        %s269 = smul.addr %s268, 8
        %s270 = scalar_lea.vmem %s4, %s269
        %s271 = smul.u32 11, %s19
        %s272 = smul.u32 11, %s19
        %v274 = vld [vmem:[%s0] sm:$0xff]
        %v275 = vld [vmem:[%s0 + $0x8] sm:$0x1]
        %v276 = vxor.u32 %v274, 2147483648
        %v277 = vxor.u32 %v275, 2147483648
        %v278 = vmul.f32 %v276, 1.442695
        %v279 = vpow.pop %v278
        %v280 = vmul.f32 %v277, 1.442695
        %v281 = vpow.pop %v280
        %v282 = vadd.f32 %v279, 1.0
        %v283 = vadd.f32 %v281, 1.0
        %v284 = vrcp.pop %v282
        %v285 = vmul.f32 1.0, %v284
        %v286 = vrcp.pop %v283
        %v287 = vmul.f32 1.0, %v286
        %v288 = vld [vmem:[%s258] sm:$0xff]
        %v289 = vld [vmem:[%s258 + $0x8] sm:$0xff]
        %v290 = vld [vmem:[%s258 + $0x10] sm:$0xff]
        %v291 = vld [vmem:[%s258 + $0x18] sm:$0xff]
        %v292 = vld [vmem:[%s258 + $0x20] sm:$0xf]
        %v293 = vld [vmem:[%s258 + $0x24] sm:$0xff]
        %v294 = vld [vmem:[%s258 + $0x2c] sm:$0xff]
        %v295 = vld [vmem:[%s258 + $0x34] sm:$0xff]
        %v296 = vld [vmem:[%s258 + $0x3c] sm:$0xff]
        %v297 = vld [vmem:[%s258 + $0x44] sm:$0xf]
        %v298 = vld [vmem:[%s258 + $0x48] sm:$0xff]
        %v299 = vld [vmem:[%s258 + $0x50] sm:$0xff]
        %v300 = vld [vmem:[%s258 + $0x58] sm:$0xff]
        %v301 = vld [vmem:[%s258 + $0x60] sm:$0xff]
        %v302 = vld [vmem:[%s258 + $0x68] sm:$0xf]
        %v303 = vld [vmem:[%s258 + $0x6c] sm:$0xff]
        %v304 = vld [vmem:[%s258 + $0x74] sm:$0xff]
        %v305 = vld [vmem:[%s258 + $0x7c] sm:$0xff]
        %v306 = vld [vmem:[%s258 + $0x84] sm:$0xff]
        %v307 = vld [vmem:[%s258 + $0x8c] sm:$0xf]
        %v308 = vld [vmem:[%s258 + $0x90] sm:$0xff]
        %v309 = vld [vmem:[%s258 + $0x98] sm:$0xff]
        %v310 = vld [vmem:[%s258 + $0xa0] sm:$0xff]
        %v311 = vld [vmem:[%s258 + $0xa8] sm:$0xff]
        %v312 = vld [vmem:[%s258 + $0xb0] sm:$0xf]
        %v313 = vld [vmem:[%s258 + $0xb4] sm:$0xff]
        %v314 = vld [vmem:[%s258 + $0xbc] sm:$0xff]
        %v315 = vld [vmem:[%s258 + $0xc4] sm:$0xff]
        %v316 = vld [vmem:[%s258 + $0xcc] sm:$0xff]
        %v317 = vld [vmem:[%s258 + $0xd4] sm:$0xf]
        %v318 = vld [vmem:[%s258 + $0xd8] sm:$0xff]
        %v319 = vld [vmem:[%s258 + $0xe0] sm:$0xff]
        %v320 = vld [vmem:[%s258 + $0xe8] sm:$0xff]
        %v321 = vld [vmem:[%s258 + $0xf0] sm:$0xff]
        %v322 = vld [vmem:[%s258 + $0xf8] sm:$0xf]
        %v323 = vld [vmem:[%s258 + $0xfc] sm:$0xff]
        %v324 = vld [vmem:[%s258 + $0x104] sm:$0xff]
        %v325 = vld [vmem:[%s258 + $0x10c] sm:$0xff]
        %v326 = vld [vmem:[%s258 + $0x114] sm:$0xff]
        %v327 = vld [vmem:[%s258 + $0x11c] sm:$0xf]
        %v328 = vld [vmem:[%s258 + $0x120] sm:$0xff]
        %v329 = vld [vmem:[%s258 + $0x128] sm:$0xff]
        %v330 = vld [vmem:[%s258 + $0x130] sm:$0xff]
        %v331 = vld [vmem:[%s258 + $0x138] sm:$0xff]
        %v332 = vld [vmem:[%s258 + $0x140] sm:$0xf]
        %v333 = vld [vmem:[%s258 + $0x144] sm:$0xff]
        %v334 = vld [vmem:[%s258 + $0x14c] sm:$0xff]
        %v335 = vld [vmem:[%s258 + $0x154] sm:$0xff]
        %v336 = vld [vmem:[%s258 + $0x15c] sm:$0xff]
        %v337 = vld [vmem:[%s258 + $0x164] sm:$0xf]
        %v338 = vld [vmem:[%s258 + $0x168] sm:$0xff]
        %v339 = vld [vmem:[%s258 + $0x170] sm:$0xff]
        %v340 = vld [vmem:[%s258 + $0x178] sm:$0xff]
        %v341 = vld [vmem:[%s258 + $0x180] sm:$0xff]
        %v342 = vld [vmem:[%s258 + $0x188] sm:$0xf]
        %v343 = vunpack.c.l.bf16 %v288
        %v344 = vunpack.c.h.bf16 %v288
        %v345 = vunpack.c.l.bf16 %v289
        %v346 = vunpack.c.h.bf16 %v289
        %v347 = vunpack.c.l.bf16 %v290
        %v348 = vunpack.c.h.bf16 %v290
        %v349 = vunpack.c.l.bf16 %v291
        %v350 = vunpack.c.h.bf16 %v291
        %v351 = vunpack.c.l.bf16 %v292
        %v352 = vunpack.c.l.bf16 %v293
        %v353 = vunpack.c.h.bf16 %v293
        %v354 = vunpack.c.l.bf16 %v294
        %v355 = vunpack.c.h.bf16 %v294
        %v356 = vunpack.c.l.bf16 %v295
        %v357 = vunpack.c.h.bf16 %v295
        %v358 = vunpack.c.l.bf16 %v296
        %v359 = vunpack.c.h.bf16 %v296
        %v360 = vunpack.c.l.bf16 %v297
        %v361 = vunpack.c.l.bf16 %v298
        %v362 = vunpack.c.h.bf16 %v298
        %v363 = vunpack.c.l.bf16 %v299
        %v364 = vunpack.c.h.bf16 %v299
        %v365 = vunpack.c.l.bf16 %v300
        %v366 = vunpack.c.h.bf16 %v300
        %v367 = vunpack.c.l.bf16 %v301
        %v368 = vunpack.c.h.bf16 %v301
        %v369 = vunpack.c.l.bf16 %v302
        %v370 = vunpack.c.l.bf16 %v303
        %v371 = vunpack.c.h.bf16 %v303
        %v372 = vunpack.c.l.bf16 %v304
        %v373 = vunpack.c.h.bf16 %v304
        %v374 = vunpack.c.l.bf16 %v305
        %v375 = vunpack.c.h.bf16 %v305
        %v376 = vunpack.c.l.bf16 %v306
        %v377 = vunpack.c.h.bf16 %v306
        %v378 = vunpack.c.l.bf16 %v307
        %v379 = vunpack.c.l.bf16 %v308
        %v380 = vunpack.c.h.bf16 %v308
        %v381 = vunpack.c.l.bf16 %v309
        %v382 = vunpack.c.h.bf16 %v309
        %v383 = vunpack.c.l.bf16 %v310
        %v384 = vunpack.c.h.bf16 %v310
        %v385 = vunpack.c.l.bf16 %v311
        %v386 = vunpack.c.h.bf16 %v311
        %v387 = vunpack.c.l.bf16 %v312
        %v388 = vunpack.c.l.bf16 %v313
        %v389 = vunpack.c.h.bf16 %v313
        %v390 = vunpack.c.l.bf16 %v314
        %v391 = vunpack.c.h.bf16 %v314
        %v392 = vunpack.c.l.bf16 %v315
        %v393 = vunpack.c.h.bf16 %v315
        %v394 = vunpack.c.l.bf16 %v316
        %v395 = vunpack.c.h.bf16 %v316
        %v396 = vunpack.c.l.bf16 %v317
        %v397 = vunpack.c.l.bf16 %v318
        %v398 = vunpack.c.h.bf16 %v318
        %v399 = vunpack.c.l.bf16 %v319
        %v400 = vunpack.c.h.bf16 %v319
        %v401 = vunpack.c.l.bf16 %v320
        %v402 = vunpack.c.h.bf16 %v320
        %v403 = vunpack.c.l.bf16 %v321
        %v404 = vunpack.c.h.bf16 %v321
        %v405 = vunpack.c.l.bf16 %v322
        %v406 = vunpack.c.l.bf16 %v323
        %v407 = vunpack.c.h.bf16 %v323
        %v408 = vunpack.c.l.bf16 %v324
        %v409 = vunpack.c.h.bf16 %v324
        %v410 = vunpack.c.l.bf16 %v325
        %v411 = vunpack.c.h.bf16 %v325
        %v412 = vunpack.c.l.bf16 %v326
        %v413 = vunpack.c.h.bf16 %v326
        %v414 = vunpack.c.l.bf16 %v327
        %v415 = vunpack.c.l.bf16 %v328
        %v416 = vunpack.c.h.bf16 %v328
        %v417 = vunpack.c.l.bf16 %v329
        %v418 = vunpack.c.h.bf16 %v329
        %v419 = vunpack.c.l.bf16 %v330
        %v420 = vunpack.c.h.bf16 %v330
        %v421 = vunpack.c.l.bf16 %v331
        %v422 = vunpack.c.h.bf16 %v331
        %v423 = vunpack.c.l.bf16 %v332
        %v424 = vunpack.c.l.bf16 %v333
        %v425 = vunpack.c.h.bf16 %v333
        %v426 = vunpack.c.l.bf16 %v334
        %v427 = vunpack.c.h.bf16 %v334
        %v428 = vunpack.c.l.bf16 %v335
        %v429 = vunpack.c.h.bf16 %v335
        %v430 = vunpack.c.l.bf16 %v336
        %v431 = vunpack.c.h.bf16 %v336
        %v432 = vunpack.c.l.bf16 %v337
        %v433 = vunpack.c.l.bf16 %v338
        %v434 = vunpack.c.h.bf16 %v338
        %v435 = vunpack.c.l.bf16 %v339
        %v436 = vunpack.c.h.bf16 %v339
        %v437 = vunpack.c.l.bf16 %v340
        %v438 = vunpack.c.h.bf16 %v340
        %v439 = vunpack.c.l.bf16 %v341
        %v440 = vunpack.c.h.bf16 %v341
        %v441 = vunpack.c.l.bf16 %v342
        %v444 = vlaneseq
        %v445 = vshrl.u32 %v444, 7
        %v446 = vsub.s32 0, %v445
        %v447 = vrot.slane %v285, %v446
        %v448 = vlaneseq
        %v449 = vshrl.u32 %v448, 7
        %v450 = vsub.s32 1, %v449
        %v451 = vrot.slane %v285, %v450
        %v452 = vlaneseq
        %v453 = vshrl.u32 %v452, 7
        %v454 = vsub.s32 2, %v453
        %v455 = vrot.slane %v285, %v454
        %v456 = vlaneseq
        %v457 = vshrl.u32 %v456, 7
        %v458 = vsub.s32 3, %v457
        %v459 = vrot.slane %v285, %v458
        %v460 = vlaneseq
        %v461 = vshrl.u32 %v460, 7
        %v462 = vsub.s32 4, %v461
        %v463 = vrot.slane %v285, %v462
        %v464 = vlaneseq
        %v465 = vshrl.u32 %v464, 7
        %v466 = vsub.s32 5, %v465
        %v467 = vrot.slane %v285, %v466
        %v468 = vlaneseq
        %v469 = vshrl.u32 %v468, 7
        %v470 = vsub.s32 6, %v469
        %v471 = vrot.slane %v285, %v470
        %v472 = vlaneseq
        %v473 = vshrl.u32 %v472, 7
        %v474 = vsub.s32 7, %v473
        %v475 = vrot.slane %v285, %v474
        %v476 = vlaneseq
        %v477 = vshrl.u32 %v476, 7
        %v478 = vsub.s32 0, %v477
        %v479 = vrot.slane %v287, %v478
        %v489 = vmul.f32 %v343, %v447
        %v490 = vmul.f32 %v344, %v451
        %v491 = vmul.f32 %v345, %v455
        %v492 = vmul.f32 %v346, %v459
        %v493 = vmul.f32 %v347, %v463
        %v494 = vmul.f32 %v348, %v467
        %v495 = vmul.f32 %v349, %v471
        %v496 = vmul.f32 %v350, %v475
        %v497 = vmul.f32 %v351, %v479
        %v498 = vmul.f32 %v352, %v447
        %v499 = vmul.f32 %v353, %v451
        %v500 = vmul.f32 %v354, %v455
        %v501 = vmul.f32 %v355, %v459
        %v502 = vmul.f32 %v356, %v463
        %v503 = vmul.f32 %v357, %v467
        %v504 = vmul.f32 %v358, %v471
        %v505 = vmul.f32 %v359, %v475
        %v506 = vmul.f32 %v360, %v479
        %v507 = vmul.f32 %v361, %v447
        %v508 = vmul.f32 %v362, %v451
        %v509 = vmul.f32 %v363, %v455
        %v510 = vmul.f32 %v364, %v459
        %v511 = vmul.f32 %v365, %v463
        %v512 = vmul.f32 %v366, %v467
        %v513 = vmul.f32 %v367, %v471
        %v514 = vmul.f32 %v368, %v475
        %v515 = vmul.f32 %v369, %v479
        %v516 = vmul.f32 %v370, %v447
        %v517 = vmul.f32 %v371, %v451
        %v518 = vmul.f32 %v372, %v455
        %v519 = vmul.f32 %v373, %v459
        %v520 = vmul.f32 %v374, %v463
        %v521 = vmul.f32 %v375, %v467
        %v522 = vmul.f32 %v376, %v471
        %v523 = vmul.f32 %v377, %v475
        %v524 = vmul.f32 %v378, %v479
        %v525 = vmul.f32 %v379, %v447
        %v526 = vmul.f32 %v380, %v451
        %v527 = vmul.f32 %v381, %v455
        %v528 = vmul.f32 %v382, %v459
        %v529 = vmul.f32 %v383, %v463
        %v530 = vmul.f32 %v384, %v467
        %v531 = vmul.f32 %v385, %v471
        %v532 = vmul.f32 %v386, %v475
        %v533 = vmul.f32 %v387, %v479
        %v534 = vmul.f32 %v388, %v447
        %v535 = vmul.f32 %v389, %v451
        %v536 = vmul.f32 %v390, %v455
        %v537 = vmul.f32 %v391, %v459
        %v538 = vmul.f32 %v392, %v463
        %v539 = vmul.f32 %v393, %v467
        %v540 = vmul.f32 %v394, %v471
        %v541 = vmul.f32 %v395, %v475
        %v542 = vmul.f32 %v396, %v479
        %v543 = vmul.f32 %v397, %v447
        %v544 = vmul.f32 %v398, %v451
        %v545 = vmul.f32 %v399, %v455
        %v546 = vmul.f32 %v400, %v459
        %v547 = vmul.f32 %v401, %v463
        %v548 = vmul.f32 %v402, %v467
        %v549 = vmul.f32 %v403, %v471
        %v550 = vmul.f32 %v404, %v475
        %v551 = vmul.f32 %v405, %v479
        %v552 = vmul.f32 %v406, %v447
        %v553 = vmul.f32 %v407, %v451
        %v554 = vmul.f32 %v408, %v455
        %v555 = vmul.f32 %v409, %v459
        %v556 = vmul.f32 %v410, %v463
        %v557 = vmul.f32 %v411, %v467
        %v558 = vmul.f32 %v412, %v471
        %v559 = vmul.f32 %v413, %v475
        %v560 = vmul.f32 %v414, %v479
        %v561 = vmul.f32 %v415, %v447
        %v562 = vmul.f32 %v416, %v451
        %v563 = vmul.f32 %v417, %v455
        %v564 = vmul.f32 %v418, %v459
        %v565 = vmul.f32 %v419, %v463
        %v566 = vmul.f32 %v420, %v467
        %v567 = vmul.f32 %v421, %v471
        %v568 = vmul.f32 %v422, %v475
        %v569 = vmul.f32 %v423, %v479
        %v570 = vmul.f32 %v424, %v447
        %v571 = vmul.f32 %v425, %v451
        %v572 = vmul.f32 %v426, %v455
        %v573 = vmul.f32 %v427, %v459
        %v574 = vmul.f32 %v428, %v463
        %v575 = vmul.f32 %v429, %v467
        %v576 = vmul.f32 %v430, %v471
        %v577 = vmul.f32 %v431, %v475
        %v578 = vmul.f32 %v432, %v479
        %v579 = vmul.f32 %v433, %v447
        %v580 = vmul.f32 %v434, %v451
        %v581 = vmul.f32 %v435, %v455
        %v582 = vmul.f32 %v436, %v459
        %v583 = vmul.f32 %v437, %v463
        %v584 = vmul.f32 %v438, %v467
        %v585 = vmul.f32 %v439, %v471
        %v586 = vmul.f32 %v440, %v475
        %v587 = vmul.f32 %v441, %v479
        %v588 = vpack.c.bf16 %v498, %v489
        %v589 = vpack.c.bf16 %v499, %v490
        %v590 = vpack.c.bf16 %v500, %v491
        %v591 = vpack.c.bf16 %v501, %v492
        %v592 = vpack.c.bf16 %v502, %v493
        %v593 = vpack.c.bf16 %v503, %v494
        %v594 = vpack.c.bf16 %v504, %v495
        %v595 = vpack.c.bf16 %v505, %v496
        %v596 = vpack.c.bf16 %v506, %v497
        %v597 = vpack.c.bf16 %v516, %v507
        %v598 = vpack.c.bf16 %v517, %v508
        %v599 = vpack.c.bf16 %v518, %v509
        %v600 = vpack.c.bf16 %v519, %v510
        %v601 = vpack.c.bf16 %v520, %v511
        %v602 = vpack.c.bf16 %v521, %v512
        %v603 = vpack.c.bf16 %v522, %v513
        %v604 = vpack.c.bf16 %v523, %v514
        %v605 = vpack.c.bf16 %v524, %v515
        %v606 = vpack.c.bf16 %v534, %v525
        %v607 = vpack.c.bf16 %v535, %v526
        %v608 = vpack.c.bf16 %v536, %v527
        %v609 = vpack.c.bf16 %v537, %v528
        %v610 = vpack.c.bf16 %v538, %v529
        %v611 = vpack.c.bf16 %v539, %v530
        %v612 = vpack.c.bf16 %v540, %v531
        %v613 = vpack.c.bf16 %v541, %v532
        %v614 = vpack.c.bf16 %v542, %v533
        %v615 = vpack.c.bf16 %v552, %v543
        %v616 = vpack.c.bf16 %v553, %v544
        %v617 = vpack.c.bf16 %v554, %v545
        %v618 = vpack.c.bf16 %v555, %v546
        %v619 = vpack.c.bf16 %v556, %v547
        %v620 = vpack.c.bf16 %v557, %v548
        %v621 = vpack.c.bf16 %v558, %v549
        %v622 = vpack.c.bf16 %v559, %v550
        %v623 = vpack.c.bf16 %v560, %v551
        %v624 = vpack.c.bf16 %v570, %v561
        %v625 = vpack.c.bf16 %v571, %v562
        %v626 = vpack.c.bf16 %v572, %v563
        %v627 = vpack.c.bf16 %v573, %v564
        %v628 = vpack.c.bf16 %v574, %v565
        %v629 = vpack.c.bf16 %v575, %v566
        %v630 = vpack.c.bf16 %v576, %v567
        %v631 = vpack.c.bf16 %v577, %v568
        %v632 = vpack.c.bf16 %v578, %v569
        %v633 = vpack.c.bf16 %v579, %v579
        %v634 = vpack.c.bf16 %v580, %v580
        %v635 = vpack.c.bf16 %v581, %v581
        %v636 = vpack.c.bf16 %v582, %v582
        %v637 = vpack.c.bf16 %v583, %v583
        %v638 = vpack.c.bf16 %v584, %v584
        %v639 = vpack.c.bf16 %v585, %v585
        %v640 = vpack.c.bf16 %v586, %v586
        %v641 = vpack.c.bf16 %v587, %v587
        %v642 = vld [vmem:[%s1] sm:$0xff]
        %v643 = vld [vmem:[%s1 + $0x8] sm:$0xff]
        %v644 = vld [vmem:[%s1 + $0x10] sm:$0xff]
        %v645 = vld [vmem:[%s1 + $0x18] sm:$0xff]
        %v646 = vld [vmem:[%s1 + $0x20] sm:$0xff]
        %v647 = vld [vmem:[%s1 + $0x28] sm:$0xff]
        %v648 = vld [vmem:[%s1 + $0x30] sm:$0xff]
        %v649 = vld [vmem:[%s1 + $0x38] sm:$0xff]
        %v650 = vld [vmem:[%s1 + $0x40] sm:$0xff]
        %v651 = vld [vmem:[%s1 + $0x48] sm:$0xff]
        %v652 = vld [vmem:[%s1 + $0x50] sm:$0xff]
        %v653 = vld [vmem:[%s1 + $0x58] sm:$0xff]
        %v654 = vld [vmem:[%s1 + $0x60] sm:$0xff]
        %v655 = vld [vmem:[%s1 + $0x68] sm:$0xff]
        %v656 = vld [vmem:[%s1 + $0x70] sm:$0xff]
        %v657 = vld [vmem:[%s1 + $0x78] sm:$0xff]
        %v658 = vld [vmem:[%s1 + $0x80] sm:$0xff]
        %v659 = vld [vmem:[%s1 + $0x88] sm:$0xff]
        %v660 = vld [vmem:[%s1 + $0x90] sm:$0xff]
        %v661 = vld [vmem:[%s1 + $0x98] sm:$0xff]
        %v662 = vld [vmem:[%s1 + $0xa0] sm:$0xff]
        %v663 = vld [vmem:[%s1 + $0xa8] sm:$0xff]
        %v664 = vld [vmem:[%s1 + $0xb0] sm:$0xff]
        %v665 = vld [vmem:[%s1 + $0xb8] sm:$0xff]
        %v666 = vld [vmem:[%s1 + $0xc0] sm:$0xff]
        %v667 = vld [vmem:[%s1 + $0xc8] sm:$0xff]
        %v668 = vld [vmem:[%s1 + $0xd0] sm:$0xff]
        %v669 = vld [vmem:[%s1 + $0xd8] sm:$0xff]
        %v670 = vld [vmem:[%s1 + $0xe0] sm:$0xff]
        %v671 = vld [vmem:[%s1 + $0xe8] sm:$0xff]
        %v672 = vld [vmem:[%s1 + $0xf0] sm:$0xff]
        %v673 = vld [vmem:[%s1 + $0xf8] sm:$0xff]
        %v674 = vld [vmem:[%s1 + $0x100] sm:$0xff]
        %v675 = vld [vmem:[%s1 + $0x108] sm:$0xff]
        %v676 = vld [vmem:[%s1 + $0x110] sm:$0xff]
        %v677 = vld [vmem:[%s1 + $0x118] sm:$0xff]
        %v678 = vld [vmem:[%s1 + $0x120] sm:$0xff]
        %v679 = vld [vmem:[%s1 + $0x128] sm:$0xff]
        %v680 = vld [vmem:[%s1 + $0x130] sm:$0xff]
        %v681 = vld [vmem:[%s1 + $0x138] sm:$0xff]
        %v682 = vld [vmem:[%s1 + $0x140] sm:$0xff]
        %v683 = vld [vmem:[%s1 + $0x148] sm:$0xff]
        %v684 = vld [vmem:[%s1 + $0x150] sm:$0xff]
        %v685 = vld [vmem:[%s1 + $0x158] sm:$0xff]
        %v686 = vld [vmem:[%s1 + $0x160] sm:$0xff]
        %v687 = vld [vmem:[%s1 + $0x168] sm:$0xff]
        %v688 = vld [vmem:[%s1 + $0x170] sm:$0xff]
        %v689 = vld [vmem:[%s1 + $0x178] sm:$0xff]
        %v690 = vld [vmem:[%s1 + $0x180] sm:$0xff]
        %v691 = vld [vmem:[%s1 + $0x188] sm:$0xff]
        %v692 = vld [vmem:[%s1 + $0x190] sm:$0xff]
        %v693 = vld [vmem:[%s1 + $0x198] sm:$0xff]
        %v694 = vld [vmem:[%s1 + $0x1a0] sm:$0xff]
        %v695 = vld [vmem:[%s1 + $0x1a8] sm:$0xff]
        %v696 = vld [vmem:[%s1 + $0x1b0] sm:$0xff]
        %v697 = vld [vmem:[%s1 + $0x1b8] sm:$0xff]
        %v698 = vld [vmem:[%s1 + $0x1c0] sm:$0xff]
        %v699 = vld [vmem:[%s1 + $0x1c8] sm:$0xff]
        %v700 = vld [vmem:[%s1 + $0x1d0] sm:$0xff]
        %v701 = vld [vmem:[%s1 + $0x1d8] sm:$0xff]
        %v702 = vld [vmem:[%s1 + $0x1e0] sm:$0xff]
        %v703 = vld [vmem:[%s1 + $0x1e8] sm:$0xff]
        %v704 = vld [vmem:[%s1 + $0x1f0] sm:$0xff]
        %v705 = vld [vmem:[%s1 + $0x1f8] sm:$0xff]
        %v706 = vld [vmem:[%s1 + $0x200] sm:$0xff]
        %v707 = vld [vmem:[%s1 + $0x208] sm:$0xff]
        %v708 = vld [vmem:[%s1 + $0x210] sm:$0xff]
        %v709 = vld [vmem:[%s1 + $0x218] sm:$0xff]
        %v710 = vld [vmem:[%s1 + $0x220] sm:$0xff]
        %v711 = vld [vmem:[%s1 + $0x228] sm:$0xff]
        %v712 = vld [vmem:[%s1 + $0x230] sm:$0xff]
        %v713 = vld [vmem:[%s1 + $0x238] sm:$0xff]
        %v714 = vld [vmem:[%s1 + $0x240] sm:$0xff]
        %v715 = vld [vmem:[%s1 + $0x248] sm:$0xff]
        %v716 = vld [vmem:[%s1 + $0x250] sm:$0xff]
        %v717 = vld [vmem:[%s1 + $0x258] sm:$0xff]
        %v718 = vld [vmem:[%s1 + $0x260] sm:$0xff]
        %v719 = vld [vmem:[%s1 + $0x268] sm:$0xff]
        %v720 = vld [vmem:[%s1 + $0x270] sm:$0xff]
        %v721 = vld [vmem:[%s1 + $0x278] sm:$0xff]
        %v722 = vld [vmem:[%s1 + $0x280] sm:$0xff]
        %v723 = vld [vmem:[%s1 + $0x288] sm:$0xff]
        %v724 = vld [vmem:[%s1 + $0x290] sm:$0xff]
        %v725 = vld [vmem:[%s1 + $0x298] sm:$0xff]
        %v726 = vld [vmem:[%s1 + $0x2a0] sm:$0xff]
        %v727 = vld [vmem:[%s1 + $0x2a8] sm:$0xff]
        %v728 = vld [vmem:[%s1 + $0x2b0] sm:$0xff]
        %v729 = vld [vmem:[%s1 + $0x2b8] sm:$0xff]
        %v730 = vld [vmem:[%s1 + $0x2c0] sm:$0xff]
        %v731 = vld [vmem:[%s1 + $0x2c8] sm:$0xff]
        %v732 = vld [vmem:[%s1 + $0x2d0] sm:$0xff]
        %v733 = vld [vmem:[%s1 + $0x2d8] sm:$0xff]
        %v734 = vld [vmem:[%s1 + $0x2e0] sm:$0xff]
        %v735 = vld [vmem:[%s1 + $0x2e8] sm:$0xff]
        %v736 = vld [vmem:[%s1 + $0x2f0] sm:$0xff]
        %v737 = vld [vmem:[%s1 + $0x2f8] sm:$0xff]
        %v738 = vld [vmem:[%s1 + $0x300] sm:$0xff]
        %v739 = vld [vmem:[%s1 + $0x308] sm:$0xff]
        %v740 = vld [vmem:[%s1 + $0x310] sm:$0xff]
        %v741 = vld [vmem:[%s1 + $0x318] sm:$0xff]
        %v742 = vld [vmem:[%s1 + $0x320] sm:$0xff]
        %v743 = vld [vmem:[%s1 + $0x328] sm:$0xff]
        %v744 = vld [vmem:[%s1 + $0x330] sm:$0xff]
        %v745 = vld [vmem:[%s1 + $0x338] sm:$0xff]
        %v746 = vld [vmem:[%s1 + $0x340] sm:$0xff]
        %v747 = vld [vmem:[%s1 + $0x348] sm:$0xff]
        %v748 = vld [vmem:[%s1 + $0x350] sm:$0xff]
        %v749 = vld [vmem:[%s1 + $0x358] sm:$0xff]
        %v750 = vld [vmem:[%s1 + $0x360] sm:$0xff]
        %v751 = vld [vmem:[%s1 + $0x368] sm:$0xff]
        %v752 = vld [vmem:[%s1 + $0x370] sm:$0xff]
        %v753 = vld [vmem:[%s1 + $0x378] sm:$0xff]
        %v754 = vld [vmem:[%s1 + $0x380] sm:$0xff]
        %v755 = vld [vmem:[%s1 + $0x388] sm:$0xff]
        %v756 = vld [vmem:[%s1 + $0x390] sm:$0xff]
        %v757 = vld [vmem:[%s1 + $0x398] sm:$0xff]
        %v758 = vld [vmem:[%s1 + $0x3a0] sm:$0xff]
        %v759 = vld [vmem:[%s1 + $0x3a8] sm:$0xff]
        %v760 = vld [vmem:[%s1 + $0x3b0] sm:$0xff]
        %v761 = vld [vmem:[%s1 + $0x3b8] sm:$0xff]
        %v762 = vld [vmem:[%s1 + $0x3c0] sm:$0xff]
        %v763 = vld [vmem:[%s1 + $0x3c8] sm:$0xff]
        %v764 = vld [vmem:[%s1 + $0x3d0] sm:$0xff]
        %v765 = vld [vmem:[%s1 + $0x3d8] sm:$0xff]
        %v766 = vld [vmem:[%s1 + $0x3e0] sm:$0xff]
        %v767 = vld [vmem:[%s1 + $0x3e8] sm:$0xff]
        %v768 = vld [vmem:[%s1 + $0x3f0] sm:$0xff]
        %v769 = vld [vmem:[%s1 + $0x3f8] sm:$0xff]
        %v770 = vld [vmem:[%s1 + $0x400] sm:$0xff]
        %v771 = vld [vmem:[%s1 + $0x408] sm:$0xff]
        %v772 = vld [vmem:[%s1 + $0x410] sm:$0xff]
        %v773 = vld [vmem:[%s1 + $0x418] sm:$0xff]
        %v906 = vunpack.c.l.b16 %v642
        %v907 = vunpack.c.h.b16 %v642
        %v908 = vunpack.c.l.b16 %v643
        %v909 = vunpack.c.h.b16 %v643
        %v910 = vunpack.c.l.b16 %v644
        %v911 = vunpack.c.h.b16 %v644
        %v912 = vunpack.c.l.b16 %v645
        %v913 = vunpack.c.h.b16 %v645
        %v914 = vunpack.c.l.b16 %v646
        %v915 = vunpack.c.h.b16 %v646
        %v916 = vunpack.c.l.b16 %v647
        %v917 = vunpack.c.h.b16 %v647
        %v918 = vunpack.c.l.b16 %v648
        %v919 = vunpack.c.h.b16 %v648
        %v920 = vunpack.c.l.b16 %v649
        %v921 = vunpack.c.h.b16 %v649
        %v922 = vunpack.c.l.b16 %v650
        %v923 = vunpack.c.h.b16 %v650
        %v924 = vunpack.c.l.b16 %v651
        %v925 = vunpack.c.h.b16 %v651
        %v926 = vunpack.c.l.b16 %v652
        %v927 = vunpack.c.h.b16 %v652
        %v928 = vunpack.c.l.b16 %v653
        %v929 = vunpack.c.h.b16 %v653
        %v930 = vunpack.c.l.b16 %v654
        %v931 = vunpack.c.h.b16 %v654
        %v932 = vunpack.c.l.b16 %v655
        %v933 = vunpack.c.h.b16 %v655
        %v934 = vunpack.c.l.b16 %v656
        %v935 = vunpack.c.h.b16 %v656
        %v936 = vunpack.c.l.b16 %v657
        %v937 = vunpack.c.h.b16 %v657
        %v938 = vunpack.c.l.b16 %v658
        %v939 = vunpack.c.h.b16 %v658
        %v940 = vunpack.c.l.b16 %v659
        %v941 = vunpack.c.h.b16 %v659
        %v942 = vunpack.c.l.b16 %v660
        %v943 = vunpack.c.h.b16 %v660
        %v944 = vunpack.c.l.b16 %v661
        %v945 = vunpack.c.h.b16 %v661
        %v946 = vunpack.c.l.b16 %v662
        %v947 = vunpack.c.h.b16 %v662
        %v948 = vunpack.c.l.b16 %v663
        %v949 = vunpack.c.h.b16 %v663
        %v950 = vunpack.c.l.b16 %v664
        %v951 = vunpack.c.h.b16 %v664
        %v952 = vunpack.c.l.b16 %v665
        %v953 = vunpack.c.h.b16 %v665
        %v954 = vunpack.c.l.b16 %v666
        %v955 = vunpack.c.h.b16 %v666
        %v956 = vunpack.c.l.b16 %v667
        %v957 = vunpack.c.h.b16 %v667
        %v958 = vunpack.c.l.b16 %v668
        %v959 = vunpack.c.h.b16 %v668
        %v960 = vunpack.c.l.b16 %v669
        %v961 = vunpack.c.h.b16 %v669
        %v962 = vunpack.c.l.b16 %v670
        %v963 = vunpack.c.h.b16 %v670
        %v964 = vunpack.c.l.b16 %v671
        %v965 = vunpack.c.h.b16 %v671
        %v966 = vunpack.c.l.b16 %v672
        %v967 = vunpack.c.h.b16 %v672
        %v968 = vunpack.c.l.b16 %v673
        %v969 = vunpack.c.h.b16 %v673
        %v970 = vunpack.c.l.b16 %v674
        %v971 = vunpack.c.h.b16 %v674
        %v972 = vunpack.c.l.b16 %v675
        %v973 = vunpack.c.h.b16 %v675
        %v974 = vunpack.c.l.b16 %v676
        %v975 = vunpack.c.h.b16 %v676
        %v976 = vunpack.c.l.b16 %v677
        %v977 = vunpack.c.h.b16 %v677
        %v978 = vunpack.c.l.b16 %v678
        %v979 = vunpack.c.h.b16 %v678
        %v980 = vunpack.c.l.b16 %v679
        %v981 = vunpack.c.h.b16 %v679
        %v982 = vunpack.c.l.b16 %v680
        %v983 = vunpack.c.h.b16 %v680
        %v984 = vunpack.c.l.b16 %v681
        %v985 = vunpack.c.h.b16 %v681
        %v986 = vunpack.c.l.b16 %v682
        %v987 = vunpack.c.h.b16 %v682
        %v988 = vunpack.c.l.b16 %v683
        %v989 = vunpack.c.h.b16 %v683
        %v990 = vunpack.c.l.b16 %v684
        %v991 = vunpack.c.h.b16 %v684
        %v992 = vunpack.c.l.b16 %v685
        %v993 = vunpack.c.h.b16 %v685
        %v994 = vunpack.c.l.b16 %v686
        %v995 = vunpack.c.h.b16 %v686
        %v996 = vunpack.c.l.b16 %v687
        %v997 = vunpack.c.h.b16 %v687
        %v998 = vunpack.c.l.b16 %v688
        %v999 = vunpack.c.h.b16 %v688
        %v1000 = vunpack.c.l.b16 %v689
        %v1001 = vunpack.c.h.b16 %v689
        %v1002 = vunpack.c.l.b16 %v690
        %v1003 = vunpack.c.h.b16 %v690
        %v1004 = vunpack.c.l.b16 %v691
        %v1005 = vunpack.c.h.b16 %v691
        %v1006 = vunpack.c.l.b16 %v692
        %v1007 = vunpack.c.h.b16 %v692
        %v1008 = vunpack.c.l.b16 %v693
        %v1009 = vunpack.c.h.b16 %v693
        %v1010 = vunpack.c.l.b16 %v694
        %v1011 = vunpack.c.h.b16 %v694
        %v1012 = vunpack.c.l.b16 %v695
        %v1013 = vunpack.c.h.b16 %v695
        %v1014 = vunpack.c.l.b16 %v696
        %v1015 = vunpack.c.h.b16 %v696
        %v1016 = vunpack.c.l.b16 %v697
        %v1017 = vunpack.c.h.b16 %v697
        %v1018 = vunpack.c.l.b16 %v698
        %v1019 = vunpack.c.h.b16 %v698
        %v1020 = vunpack.c.l.b16 %v699
        %v1021 = vunpack.c.h.b16 %v699
        %v1022 = vunpack.c.l.b16 %v700
        %v1023 = vunpack.c.h.b16 %v700
        %v1024 = vunpack.c.l.b16 %v701
        %v1025 = vunpack.c.h.b16 %v701
        %v1026 = vunpack.c.l.b16 %v702
        %v1027 = vunpack.c.h.b16 %v702
        %v1028 = vunpack.c.l.b16 %v703
        %v1029 = vunpack.c.h.b16 %v703
        %v1030 = vunpack.c.l.b16 %v704
        %v1031 = vunpack.c.h.b16 %v704
        %v1032 = vunpack.c.l.b16 %v705
        %v1033 = vunpack.c.h.b16 %v705
        %v1034 = vunpack.c.l.b16 %v706
        %v1035 = vunpack.c.h.b16 %v706
        %v1036 = vunpack.c.l.b16 %v707
        %v1037 = vunpack.c.h.b16 %v707
        %v1038 = vunpack.c.l.b16 %v708
        %v1039 = vunpack.c.h.b16 %v708
        %v1040 = vunpack.c.l.b16 %v709
        %v1041 = vunpack.c.h.b16 %v709
        %v1042 = vunpack.c.l.b16 %v710
        %v1043 = vunpack.c.h.b16 %v710
        %v1044 = vunpack.c.l.b16 %v711
        %v1045 = vunpack.c.h.b16 %v711
        %v1046 = vunpack.c.l.b16 %v712
        %v1047 = vunpack.c.h.b16 %v712
        %v1048 = vunpack.c.l.b16 %v713
        %v1049 = vunpack.c.h.b16 %v713
        %v1050 = vunpack.c.l.b16 %v714
        %v1051 = vunpack.c.h.b16 %v714
        %v1052 = vunpack.c.l.b16 %v715
        %v1053 = vunpack.c.h.b16 %v715
        %v1054 = vunpack.c.l.b16 %v716
        %v1055 = vunpack.c.h.b16 %v716
        %v1056 = vunpack.c.l.b16 %v717
        %v1057 = vunpack.c.h.b16 %v717
        %v1058 = vunpack.c.l.b16 %v718
        %v1059 = vunpack.c.h.b16 %v718
        %v1060 = vunpack.c.l.b16 %v719
        %v1061 = vunpack.c.h.b16 %v719
        %v1062 = vunpack.c.l.b16 %v720
        %v1063 = vunpack.c.h.b16 %v720
        %v1064 = vunpack.c.l.b16 %v721
        %v1065 = vunpack.c.h.b16 %v721
        %v1066 = vunpack.c.l.b16 %v722
        %v1067 = vunpack.c.h.b16 %v722
        %v1068 = vunpack.c.l.b16 %v723
        %v1069 = vunpack.c.h.b16 %v723
        %v1070 = vunpack.c.l.b16 %v724
        %v1071 = vunpack.c.h.b16 %v724
        %v1072 = vunpack.c.l.b16 %v725
        %v1073 = vunpack.c.h.b16 %v725
        %v1074 = vunpack.c.l.b16 %v726
        %v1075 = vunpack.c.h.b16 %v726
        %v1076 = vunpack.c.l.b16 %v727
        %v1077 = vunpack.c.h.b16 %v727
        %v1078 = vunpack.c.l.b16 %v728
        %v1079 = vunpack.c.h.b16 %v728
        %v1080 = vunpack.c.l.b16 %v729
        %v1081 = vunpack.c.h.b16 %v729
        %v1082 = vunpack.c.l.b16 %v730
        %v1083 = vunpack.c.h.b16 %v730
        %v1084 = vunpack.c.l.b16 %v731
        %v1085 = vunpack.c.h.b16 %v731
        %v1086 = vunpack.c.l.b16 %v732
        %v1087 = vunpack.c.h.b16 %v732
        %v1088 = vunpack.c.l.b16 %v733
        %v1089 = vunpack.c.h.b16 %v733
        %v1090 = vunpack.c.l.b16 %v734
        %v1091 = vunpack.c.h.b16 %v734
        %v1092 = vunpack.c.l.b16 %v735
        %v1093 = vunpack.c.h.b16 %v735
        %v1094 = vunpack.c.l.b16 %v736
        %v1095 = vunpack.c.h.b16 %v736
        %v1096 = vunpack.c.l.b16 %v737
        %v1097 = vunpack.c.h.b16 %v737
        %v1098 = vunpack.c.l.b16 %v738
        %v1099 = vunpack.c.h.b16 %v738
        %v1100 = vunpack.c.l.b16 %v739
        %v1101 = vunpack.c.h.b16 %v739
        %v1102 = vunpack.c.l.b16 %v740
        %v1103 = vunpack.c.h.b16 %v740
        %v1104 = vunpack.c.l.b16 %v741
        %v1105 = vunpack.c.h.b16 %v741
        %v1106 = vunpack.c.l.b16 %v742
        %v1107 = vunpack.c.h.b16 %v742
        %v1108 = vunpack.c.l.b16 %v743
        %v1109 = vunpack.c.h.b16 %v743
        %v1110 = vunpack.c.l.b16 %v744
        %v1111 = vunpack.c.h.b16 %v744
        %v1112 = vunpack.c.l.b16 %v745
        %v1113 = vunpack.c.h.b16 %v745
        %v1114 = vunpack.c.l.b16 %v746
        %v1115 = vunpack.c.h.b16 %v746
        %v1116 = vunpack.c.l.b16 %v747
        %v1117 = vunpack.c.h.b16 %v747
        %v1118 = vunpack.c.l.b16 %v748
        %v1119 = vunpack.c.h.b16 %v748
        %v1120 = vunpack.c.l.b16 %v749
        %v1121 = vunpack.c.h.b16 %v749
        %v1122 = vunpack.c.l.b16 %v750
        %v1123 = vunpack.c.h.b16 %v750
        %v1124 = vunpack.c.l.b16 %v751
        %v1125 = vunpack.c.h.b16 %v751
        %v1126 = vunpack.c.l.b16 %v752
        %v1127 = vunpack.c.h.b16 %v752
        %v1128 = vunpack.c.l.b16 %v753
        %v1129 = vunpack.c.h.b16 %v753
        %v1130 = vunpack.c.l.b16 %v754
        %v1131 = vunpack.c.h.b16 %v754
        %v1132 = vunpack.c.l.b16 %v755
        %v1133 = vunpack.c.h.b16 %v755
        %v1134 = vunpack.c.l.b16 %v756
        %v1135 = vunpack.c.h.b16 %v756
        %v1136 = vunpack.c.l.b16 %v757
        %v1137 = vunpack.c.h.b16 %v757
        %v1138 = vunpack.c.l.b16 %v758
        %v1139 = vunpack.c.h.b16 %v758
        %v1140 = vunpack.c.l.b16 %v759
        %v1141 = vunpack.c.h.b16 %v759
        %v1142 = vunpack.c.l.b16 %v760
        %v1143 = vunpack.c.h.b16 %v760
        %v1144 = vunpack.c.l.b16 %v761
        %v1145 = vunpack.c.h.b16 %v761
        %v1146 = vunpack.c.l.b16 %v762
        %v1147 = vunpack.c.h.b16 %v762
        %v1148 = vunpack.c.l.b16 %v763
        %v1149 = vunpack.c.h.b16 %v763
        %v1150 = vunpack.c.l.b16 %v764
        %v1151 = vunpack.c.h.b16 %v764
        %v1152 = vunpack.c.l.b16 %v765
        %v1153 = vunpack.c.h.b16 %v765
        %v1154 = vunpack.c.l.b16 %v766
        %v1155 = vunpack.c.h.b16 %v766
        %v1156 = vunpack.c.l.b16 %v767
        %v1157 = vunpack.c.h.b16 %v767
        %v1158 = vunpack.c.l.b16 %v768
        %v1159 = vunpack.c.h.b16 %v768
        %v1160 = vunpack.c.l.b16 %v769
        %v1161 = vunpack.c.h.b16 %v769
        %v1162 = vunpack.c.l.b16 %v770
        %v1163 = vunpack.c.h.b16 %v770
        %v1164 = vunpack.c.l.b16 %v771
        %v1165 = vunpack.c.h.b16 %v771
        %v1166 = vunpack.c.l.b16 %v772
        %v1167 = vunpack.c.h.b16 %v772
        %v1168 = vunpack.c.l.b16 %v773
        %v1169 = vunpack.c.h.b16 %v773
        %v1170 = vpack.c.b16 %v908, %v906
        %v1171 = vpack.c.b16 %v909, %v907
        %v1172 = vpack.c.b16 %v912, %v910
        %v1173 = vpack.c.b16 %v913, %v911
        %v1174 = vpack.c.b16 %v916, %v914
        %v1175 = vpack.c.b16 %v917, %v915
        %v1176 = vpack.c.b16 %v920, %v918
        %v1177 = vpack.c.b16 %v921, %v919
        %v1178 = vpack.c.b16 %v924, %v922
        %v1179 = vpack.c.b16 %v925, %v923
        %v1180 = vpack.c.b16 %v928, %v926
        %v1181 = vpack.c.b16 %v929, %v927
        %v1182 = vpack.c.b16 %v932, %v930
        %v1183 = vpack.c.b16 %v933, %v931
        %v1184 = vpack.c.b16 %v936, %v934
        %v1185 = vpack.c.b16 %v937, %v935
        %v1186 = vpack.c.b16 %v940, %v938
        %v1187 = vpack.c.b16 %v941, %v939
        %v1188 = vpack.c.b16 %v944, %v942
        %v1189 = vpack.c.b16 %v945, %v943
        %v1190 = vpack.c.b16 %v948, %v946
        %v1191 = vpack.c.b16 %v949, %v947
        %v1192 = vpack.c.b16 %v952, %v950
        %v1193 = vpack.c.b16 %v953, %v951
        %v1194 = vpack.c.b16 %v956, %v954
        %v1195 = vpack.c.b16 %v957, %v955
        %v1196 = vpack.c.b16 %v960, %v958
        %v1197 = vpack.c.b16 %v961, %v959
        %v1198 = vpack.c.b16 %v964, %v962
        %v1199 = vpack.c.b16 %v965, %v963
        %v1200 = vpack.c.b16 %v968, %v966
        %v1201 = vpack.c.b16 %v969, %v967
        %v1202 = vpack.c.b16 %v972, %v970
        %v1203 = vpack.c.b16 %v973, %v971
        %v1204 = vpack.c.b16 %v976, %v974
        %v1205 = vpack.c.b16 %v977, %v975
        %v1206 = vpack.c.b16 %v980, %v978
        %v1207 = vpack.c.b16 %v981, %v979
        %v1208 = vpack.c.b16 %v984, %v982
        %v1209 = vpack.c.b16 %v985, %v983
        %v1210 = vpack.c.b16 %v988, %v986
        %v1211 = vpack.c.b16 %v989, %v987
        %v1212 = vpack.c.b16 %v992, %v990
        %v1213 = vpack.c.b16 %v993, %v991
        %v1214 = vpack.c.b16 %v996, %v994
        %v1215 = vpack.c.b16 %v997, %v995
        %v1216 = vpack.c.b16 %v1000, %v998
        %v1217 = vpack.c.b16 %v1001, %v999
        %v1218 = vpack.c.b16 %v1004, %v1002
        %v1219 = vpack.c.b16 %v1005, %v1003
        %v1220 = vpack.c.b16 %v1008, %v1006
        %v1221 = vpack.c.b16 %v1009, %v1007
        %v1222 = vpack.c.b16 %v1012, %v1010
        %v1223 = vpack.c.b16 %v1013, %v1011
        %v1224 = vpack.c.b16 %v1016, %v1014
        %v1225 = vpack.c.b16 %v1017, %v1015
        %v1226 = vpack.c.b16 %v1020, %v1018
        %v1227 = vpack.c.b16 %v1021, %v1019
        %v1228 = vpack.c.b16 %v1024, %v1022
        %v1229 = vpack.c.b16 %v1025, %v1023
        %v1230 = vpack.c.b16 %v1028, %v1026
        %v1231 = vpack.c.b16 %v1029, %v1027
        %v1232 = vpack.c.b16 %v1032, %v1030
        %v1233 = vpack.c.b16 %v1033, %v1031
        %v1234 = vpack.c.b16 %v1036, %v1034
        %v1235 = vpack.c.b16 %v1037, %v1035
        %v1236 = vpack.c.b16 %v1040, %v1038
        %v1237 = vpack.c.b16 %v1041, %v1039
        %v1238 = vpack.c.b16 %v1044, %v1042
        %v1239 = vpack.c.b16 %v1045, %v1043
        %v1240 = vpack.c.b16 %v1048, %v1046
        %v1241 = vpack.c.b16 %v1049, %v1047
        %v1242 = vpack.c.b16 %v1052, %v1050
        %v1243 = vpack.c.b16 %v1053, %v1051
        %v1244 = vpack.c.b16 %v1056, %v1054
        %v1245 = vpack.c.b16 %v1057, %v1055
        %v1246 = vpack.c.b16 %v1060, %v1058
        %v1247 = vpack.c.b16 %v1061, %v1059
        %v1248 = vpack.c.b16 %v1064, %v1062
        %v1249 = vpack.c.b16 %v1065, %v1063
        %v1250 = vpack.c.b16 %v1068, %v1066
        %v1251 = vpack.c.b16 %v1069, %v1067
        %v1252 = vpack.c.b16 %v1072, %v1070
        %v1253 = vpack.c.b16 %v1073, %v1071
        %v1254 = vpack.c.b16 %v1076, %v1074
        %v1255 = vpack.c.b16 %v1077, %v1075
        %v1256 = vpack.c.b16 %v1080, %v1078
        %v1257 = vpack.c.b16 %v1081, %v1079
        %v1258 = vpack.c.b16 %v1084, %v1082
        %v1259 = vpack.c.b16 %v1085, %v1083
        %v1260 = vpack.c.b16 %v1088, %v1086
        %v1261 = vpack.c.b16 %v1089, %v1087
        %v1262 = vpack.c.b16 %v1092, %v1090
        %v1263 = vpack.c.b16 %v1093, %v1091
        %v1264 = vpack.c.b16 %v1096, %v1094
        %v1265 = vpack.c.b16 %v1097, %v1095
        %v1266 = vpack.c.b16 %v1100, %v1098
        %v1267 = vpack.c.b16 %v1101, %v1099
        %v1268 = vpack.c.b16 %v1104, %v1102
        %v1269 = vpack.c.b16 %v1105, %v1103
        %v1270 = vpack.c.b16 %v1108, %v1106
        %v1271 = vpack.c.b16 %v1109, %v1107
        %v1272 = vpack.c.b16 %v1112, %v1110
        %v1273 = vpack.c.b16 %v1113, %v1111
        %v1274 = vpack.c.b16 %v1116, %v1114
        %v1275 = vpack.c.b16 %v1117, %v1115
        %v1276 = vpack.c.b16 %v1120, %v1118
        %v1277 = vpack.c.b16 %v1121, %v1119
        %v1278 = vpack.c.b16 %v1124, %v1122
        %v1279 = vpack.c.b16 %v1125, %v1123
        %v1280 = vpack.c.b16 %v1128, %v1126
        %v1281 = vpack.c.b16 %v1129, %v1127
        %v1282 = vpack.c.b16 %v1132, %v1130
        %v1283 = vpack.c.b16 %v1133, %v1131
        %v1284 = vpack.c.b16 %v1136, %v1134
        %v1285 = vpack.c.b16 %v1137, %v1135
        %v1286 = vpack.c.b16 %v1140, %v1138
        %v1287 = vpack.c.b16 %v1141, %v1139
        %v1288 = vpack.c.b16 %v1144, %v1142
        %v1289 = vpack.c.b16 %v1145, %v1143
        %v1290 = vpack.c.b16 %v1148, %v1146
        %v1291 = vpack.c.b16 %v1149, %v1147
        %v1292 = vpack.c.b16 %v1152, %v1150
        %v1293 = vpack.c.b16 %v1153, %v1151
        %v1294 = vpack.c.b16 %v1156, %v1154
        %v1295 = vpack.c.b16 %v1157, %v1155
        %v1296 = vpack.c.b16 %v1160, %v1158
        %v1297 = vpack.c.b16 %v1161, %v1159
        %v1298 = vpack.c.b16 %v1164, %v1162
        %v1299 = vpack.c.b16 %v1165, %v1163
        %v1300 = vpack.c.b16 %v1168, %v1166
        %v1301 = vpack.c.b16 %v1169, %v1167
        %vm1434 = vcmask 261120
        %v1436 = vsel %vm1434, %v596, 0
        %v1439 = vsel %vm1434, %v605, 0
        %v1442 = vsel %vm1434, %v614, 0
        %v1445 = vsel %vm1434, %v623, 0
        %v1448 = vsel %vm1434, %v632, 0
        %v1451 = vsel %vm1434, %v641, 0
        %1453 = vmatprep.subr.bf16.mxu0 %v1185
        %1454 = vmatpush1.bf16.msra.mxu0 %v1184
        %1455 = vmatprep.subr.bf16.mxu0 %v1183
        %1456 = vmatpush1.bf16.msra.mxu0 %v1182
        %1457 = vmatprep.subr.bf16.mxu0 %v1181
        %1458 = vmatpush1.bf16.msra.mxu0 %v1180
        %1459 = vmatprep.subr.bf16.mxu0 %v1179
        %1460 = vmatpush1.bf16.msra.mxu0 %v1178
        %1461 = vmatprep.subr.bf16.mxu0 %v1177
        %1462 = vmatpush1.bf16.msra.mxu0 %v1176
        %1463 = vmatprep.subr.bf16.mxu0 %v1175
        %1464 = vmatpush1.bf16.msra.mxu0 %v1174
        %1465 = vmatprep.subr.bf16.mxu0 %v1173
        %1466 = vmatpush1.bf16.msra.mxu0 %v1172
        %1467 = vmatprep.subr.bf16.mxu0 %v1171
        %1468 = vmatpush1.bf16.msra.mxu0 %v1170
        %1469 = vmatprep.subr.bf16.mxu0 %v1201
        %1470 = vmatpush2.bf16.msra.mxu0 %v1200
        %1471 = vmatprep.subr.bf16.mxu0 %v1199
        %1472 = vmatpush2.bf16.msra.mxu0 %v1198
        %1473 = vmatprep.subr.bf16.mxu0 %v1197
        %1474 = vmatpush2.bf16.msra.mxu0 %v1196
        %1475 = vmatprep.subr.bf16.mxu0 %v1195
        %1476 = vmatpush2.bf16.msra.mxu0 %v1194
        %1477 = vmatprep.subr.bf16.mxu0 %v1193
        %1478 = vmatpush2.bf16.msra.mxu0 %v1192
        %1479 = vmatprep.subr.bf16.mxu0 %v1191
        %1480 = vmatpush2.bf16.msra.mxu0 %v1190
        %1481 = vmatprep.subr.bf16.mxu0 %v1189
        %1482 = vmatpush2.bf16.msra.mxu0 %v1188
        %1483 = vmatprep.subr.bf16.mxu0 %v1187
        %1484 = vmatpush2.bf16.msra.mxu0 %v1186
        %1485 = vmatprep.mubr.bf16.mxu0 %v589
        %1486 = vmatmul.mubr.bf16.gmra.mxu0 %v588
        %v1487 = vpop.f32.mrf.mxu0
        %v1488 = vadd.f32 0.0, %v1487
        %v1489 = vpop.f32.mrf.mxu0
        %v1490 = vadd.f32 0.0, %v1489
        %v1491 = vpop.f32.mrf.mxu0
        %v1492 = vadd.f32 0.0, %v1491
        %v1493 = vpop.f32.mrf.mxu0
        %v1494 = vadd.f32 0.0, %v1493
        %1495 = vmatprep.mubr.bf16.mxu0 %v598
        %1496 = vmatmul.mubr.bf16.gmra.mxu0 %v597
        %v1497 = vpop.f32.mrf.mxu0
        %v1498 = vadd.f32 0.0, %v1497
        %v1499 = vpop.f32.mrf.mxu0
        %v1500 = vadd.f32 0.0, %v1499
        %v1501 = vpop.f32.mrf.mxu0
        %v1502 = vadd.f32 0.0, %v1501
        %v1503 = vpop.f32.mrf.mxu0
        %v1504 = vadd.f32 0.0, %v1503
        %1505 = vmatprep.mubr.bf16.mxu0 %v607
        %1506 = vmatmul.mubr.bf16.gmra.mxu0 %v606
        %v1507 = vpop.f32.mrf.mxu0
        %v1508 = vadd.f32 0.0, %v1507
        %v1509 = vpop.f32.mrf.mxu0
        %v1510 = vadd.f32 0.0, %v1509
        %v1511 = vpop.f32.mrf.mxu0
        %v1512 = vadd.f32 0.0, %v1511
        %v1513 = vpop.f32.mrf.mxu0
        %v1514 = vadd.f32 0.0, %v1513
        %1515 = vmatprep.mubr.bf16.mxu0 %v616
        %1516 = vmatmul.mubr.bf16.gmra.mxu0 %v615
        %v1517 = vpop.f32.mrf.mxu0
        %v1518 = vadd.f32 0.0, %v1517
        %v1519 = vpop.f32.mrf.mxu0
        %v1520 = vadd.f32 0.0, %v1519
        %v1521 = vpop.f32.mrf.mxu0
        %v1522 = vadd.f32 0.0, %v1521
        %v1523 = vpop.f32.mrf.mxu0
        %v1524 = vadd.f32 0.0, %v1523
        %1525 = vmatprep.mubr.bf16.mxu0 %v625
        %1526 = vmatmul.mubr.bf16.gmra.mxu0 %v624
        %v1527 = vpop.f32.mrf.mxu0
        %v1528 = vadd.f32 0.0, %v1527
        %v1529 = vpop.f32.mrf.mxu0
        %v1530 = vadd.f32 0.0, %v1529
        %v1531 = vpop.f32.mrf.mxu0
        %v1532 = vadd.f32 0.0, %v1531
        %v1533 = vpop.f32.mrf.mxu0
        %v1534 = vadd.f32 0.0, %v1533
        %1535 = vmatprep.mubr.bf16.mxu0 %v634
        %1536 = vmatmul.mubr.bf16.gmra.mxu0 %v633
        %v1537 = vpop.f32.mrf.mxu0
        %v1538 = vadd.f32 0.0, %v1537
        %v1539 = vpop.f32.mrf.mxu0
        %v1540 = vadd.f32 0.0, %v1539
        %v1541 = vpop.f32.mrf.mxu0
        %v1542 = vpop.f32.mrf.mxu0
        %1543 = vdwg.mxu0
        %1544 = vmatprep.subr.bf16.mxu0 %v1217
        %1545 = vmatpush1.bf16.msra.mxu0 %v1216
        %1546 = vmatprep.subr.bf16.mxu0 %v1215
        %1547 = vmatpush1.bf16.msra.mxu0 %v1214
        %1548 = vmatprep.subr.bf16.mxu0 %v1213
        %1549 = vmatpush1.bf16.msra.mxu0 %v1212
        %1550 = vmatprep.subr.bf16.mxu0 %v1211
        %1551 = vmatpush1.bf16.msra.mxu0 %v1210
        %1552 = vmatprep.subr.bf16.mxu0 %v1209
        %1553 = vmatpush1.bf16.msra.mxu0 %v1208
        %1554 = vmatprep.subr.bf16.mxu0 %v1207
        %1555 = vmatpush1.bf16.msra.mxu0 %v1206
        %1556 = vmatprep.subr.bf16.mxu0 %v1205
        %1557 = vmatpush1.bf16.msra.mxu0 %v1204
        %1558 = vmatprep.subr.bf16.mxu0 %v1203
        %1559 = vmatpush1.bf16.msra.mxu0 %v1202
        %1560 = vmatprep.subr.bf16.mxu0 %v1233
        %1561 = vmatpush2.bf16.msra.mxu0 %v1232
        %1562 = vmatprep.subr.bf16.mxu0 %v1231
        %1563 = vmatpush2.bf16.msra.mxu0 %v1230
        %1564 = vmatprep.subr.bf16.mxu0 %v1229
        %1565 = vmatpush2.bf16.msra.mxu0 %v1228
        %1566 = vmatprep.subr.bf16.mxu0 %v1227
        %1567 = vmatpush2.bf16.msra.mxu0 %v1226
        %1568 = vmatprep.subr.bf16.mxu0 %v1225
        %1569 = vmatpush2.bf16.msra.mxu0 %v1224
        %1570 = vmatprep.subr.bf16.mxu0 %v1223
        %1571 = vmatpush2.bf16.msra.mxu0 %v1222
        %1572 = vmatprep.subr.bf16.mxu0 %v1221
        %1573 = vmatpush2.bf16.msra.mxu0 %v1220
        %1574 = vmatprep.subr.bf16.mxu0 %v1219
        %1575 = vmatpush2.bf16.msra.mxu0 %v1218
        %1576 = vmatprep.mubr.bf16.mxu0 %v591
        %1577 = vmatmul.mubr.bf16.gmra.mxu0 %v590
        %v1578 = vpop.f32.mrf.mxu0
        %v1579 = vadd.f32 %v1488, %v1578
        %v1580 = vpop.f32.mrf.mxu0
        %v1581 = vadd.f32 %v1490, %v1580
        %v1582 = vpop.f32.mrf.mxu0
        %v1583 = vadd.f32 %v1492, %v1582
        %v1584 = vpop.f32.mrf.mxu0
        %v1585 = vadd.f32 %v1494, %v1584
        %1586 = vmatprep.mubr.bf16.mxu0 %v600
        %1587 = vmatmul.mubr.bf16.gmra.mxu0 %v599
        %v1588 = vpop.f32.mrf.mxu0
        %v1589 = vadd.f32 %v1498, %v1588
        %v1590 = vpop.f32.mrf.mxu0
        %v1591 = vadd.f32 %v1500, %v1590
        %v1592 = vpop.f32.mrf.mxu0
        %v1593 = vadd.f32 %v1502, %v1592
        %v1594 = vpop.f32.mrf.mxu0
        %v1595 = vadd.f32 %v1504, %v1594
        %1596 = vmatprep.mubr.bf16.mxu0 %v609
        %1597 = vmatmul.mubr.bf16.gmra.mxu0 %v608
        %v1598 = vpop.f32.mrf.mxu0
        %v1599 = vadd.f32 %v1508, %v1598
        %v1600 = vpop.f32.mrf.mxu0
        %v1601 = vadd.f32 %v1510, %v1600
        %v1602 = vpop.f32.mrf.mxu0
        %v1603 = vadd.f32 %v1512, %v1602
        %v1604 = vpop.f32.mrf.mxu0
        %v1605 = vadd.f32 %v1514, %v1604
        %1606 = vmatprep.mubr.bf16.mxu0 %v618
        %1607 = vmatmul.mubr.bf16.gmra.mxu0 %v617
        %v1608 = vpop.f32.mrf.mxu0
        %v1609 = vadd.f32 %v1518, %v1608
        %v1610 = vpop.f32.mrf.mxu0
        %v1611 = vadd.f32 %v1520, %v1610
        %v1612 = vpop.f32.mrf.mxu0
        %v1613 = vadd.f32 %v1522, %v1612
        %v1614 = vpop.f32.mrf.mxu0
        %v1615 = vadd.f32 %v1524, %v1614
        %1616 = vmatprep.mubr.bf16.mxu0 %v627
        %1617 = vmatmul.mubr.bf16.gmra.mxu0 %v626
        %v1618 = vpop.f32.mrf.mxu0
        %v1619 = vadd.f32 %v1528, %v1618
        %v1620 = vpop.f32.mrf.mxu0
        %v1621 = vadd.f32 %v1530, %v1620
        %v1622 = vpop.f32.mrf.mxu0
        %v1623 = vadd.f32 %v1532, %v1622
        %v1624 = vpop.f32.mrf.mxu0
        %v1625 = vadd.f32 %v1534, %v1624
        %1626 = vmatprep.mubr.bf16.mxu0 %v636
        %1627 = vmatmul.mubr.bf16.gmra.mxu0 %v635
        %v1628 = vpop.f32.mrf.mxu0
        %v1629 = vadd.f32 %v1538, %v1628
        %v1630 = vpop.f32.mrf.mxu0
        %v1631 = vadd.f32 %v1540, %v1630
        %v1632 = vpop.f32.mrf.mxu0
        %v1633 = vpop.f32.mrf.mxu0
        %1634 = vdwg.mxu0
        %1635 = vmatprep.subr.bf16.mxu0 %v1249
        %1636 = vmatpush1.bf16.msra.mxu0 %v1248
        %1637 = vmatprep.subr.bf16.mxu0 %v1247
        %1638 = vmatpush1.bf16.msra.mxu0 %v1246
        %1639 = vmatprep.subr.bf16.mxu0 %v1245
        %1640 = vmatpush1.bf16.msra.mxu0 %v1244
        %1641 = vmatprep.subr.bf16.mxu0 %v1243
        %1642 = vmatpush1.bf16.msra.mxu0 %v1242
        %1643 = vmatprep.subr.bf16.mxu0 %v1241
        %1644 = vmatpush1.bf16.msra.mxu0 %v1240
        %1645 = vmatprep.subr.bf16.mxu0 %v1239
        %1646 = vmatpush1.bf16.msra.mxu0 %v1238
        %1647 = vmatprep.subr.bf16.mxu0 %v1237
        %1648 = vmatpush1.bf16.msra.mxu0 %v1236
        %1649 = vmatprep.subr.bf16.mxu0 %v1235
        %1650 = vmatpush1.bf16.msra.mxu0 %v1234
        %1651 = vmatprep.subr.bf16.mxu0 %v1265
        %1652 = vmatpush2.bf16.msra.mxu0 %v1264
        %1653 = vmatprep.subr.bf16.mxu0 %v1263
        %1654 = vmatpush2.bf16.msra.mxu0 %v1262
        %1655 = vmatprep.subr.bf16.mxu0 %v1261
        %1656 = vmatpush2.bf16.msra.mxu0 %v1260
        %1657 = vmatprep.subr.bf16.mxu0 %v1259
        %1658 = vmatpush2.bf16.msra.mxu0 %v1258
        %1659 = vmatprep.subr.bf16.mxu0 %v1257
        %1660 = vmatpush2.bf16.msra.mxu0 %v1256
        %1661 = vmatprep.subr.bf16.mxu0 %v1255
        %1662 = vmatpush2.bf16.msra.mxu0 %v1254
        %1663 = vmatprep.subr.bf16.mxu0 %v1253
        %1664 = vmatpush2.bf16.msra.mxu0 %v1252
        %1665 = vmatprep.subr.bf16.mxu0 %v1251
        %1666 = vmatpush2.bf16.msra.mxu0 %v1250
        %1667 = vmatprep.mubr.bf16.mxu0 %v593
        %1668 = vmatmul.mubr.bf16.gmra.mxu0 %v592
        %v1669 = vpop.f32.mrf.mxu0
        %v1670 = vadd.f32 %v1579, %v1669
        %v1671 = vpop.f32.mrf.mxu0
        %v1672 = vadd.f32 %v1581, %v1671
        %v1673 = vpop.f32.mrf.mxu0
        %v1674 = vadd.f32 %v1583, %v1673
        %v1675 = vpop.f32.mrf.mxu0
        %v1676 = vadd.f32 %v1585, %v1675
        %1677 = vmatprep.mubr.bf16.mxu0 %v602
        %1678 = vmatmul.mubr.bf16.gmra.mxu0 %v601
        %v1679 = vpop.f32.mrf.mxu0
        %v1680 = vadd.f32 %v1589, %v1679
        %v1681 = vpop.f32.mrf.mxu0
        %v1682 = vadd.f32 %v1591, %v1681
        %v1683 = vpop.f32.mrf.mxu0
        %v1684 = vadd.f32 %v1593, %v1683
        %v1685 = vpop.f32.mrf.mxu0
        %v1686 = vadd.f32 %v1595, %v1685
        %1687 = vmatprep.mubr.bf16.mxu0 %v611
        %1688 = vmatmul.mubr.bf16.gmra.mxu0 %v610
        %v1689 = vpop.f32.mrf.mxu0
        %v1690 = vadd.f32 %v1599, %v1689
        %v1691 = vpop.f32.mrf.mxu0
        %v1692 = vadd.f32 %v1601, %v1691
        %v1693 = vpop.f32.mrf.mxu0
        %v1694 = vadd.f32 %v1603, %v1693
        %v1695 = vpop.f32.mrf.mxu0
        %v1696 = vadd.f32 %v1605, %v1695
        %1697 = vmatprep.mubr.bf16.mxu0 %v620
        %1698 = vmatmul.mubr.bf16.gmra.mxu0 %v619
        %v1699 = vpop.f32.mrf.mxu0
        %v1700 = vadd.f32 %v1609, %v1699
        %v1701 = vpop.f32.mrf.mxu0
        %v1702 = vadd.f32 %v1611, %v1701
        %v1703 = vpop.f32.mrf.mxu0
        %v1704 = vadd.f32 %v1613, %v1703
        %v1705 = vpop.f32.mrf.mxu0
        %v1706 = vadd.f32 %v1615, %v1705
        %1707 = vmatprep.mubr.bf16.mxu0 %v629
        %1708 = vmatmul.mubr.bf16.gmra.mxu0 %v628
        %v1709 = vpop.f32.mrf.mxu0
        %v1710 = vadd.f32 %v1619, %v1709
        %v1711 = vpop.f32.mrf.mxu0
        %v1712 = vadd.f32 %v1621, %v1711
        %v1713 = vpop.f32.mrf.mxu0
        %v1714 = vadd.f32 %v1623, %v1713
        %v1715 = vpop.f32.mrf.mxu0
        %v1716 = vadd.f32 %v1625, %v1715
        %1717 = vmatprep.mubr.bf16.mxu0 %v638
        %1718 = vmatmul.mubr.bf16.gmra.mxu0 %v637
        %v1719 = vpop.f32.mrf.mxu0
        %v1720 = vadd.f32 %v1629, %v1719
        %v1721 = vpop.f32.mrf.mxu0
        %v1722 = vadd.f32 %v1631, %v1721
        %v1723 = vpop.f32.mrf.mxu0
        %v1724 = vpop.f32.mrf.mxu0
        %1725 = vdwg.mxu0
        %1726 = vmatprep.subr.bf16.mxu0 %v1281
        %1727 = vmatpush1.bf16.msra.mxu0 %v1280
        %1728 = vmatprep.subr.bf16.mxu0 %v1279
        %1729 = vmatpush1.bf16.msra.mxu0 %v1278
        %1730 = vmatprep.subr.bf16.mxu0 %v1277
        %1731 = vmatpush1.bf16.msra.mxu0 %v1276
        %1732 = vmatprep.subr.bf16.mxu0 %v1275
        %1733 = vmatpush1.bf16.msra.mxu0 %v1274
        %1734 = vmatprep.subr.bf16.mxu0 %v1273
        %1735 = vmatpush1.bf16.msra.mxu0 %v1272
        %1736 = vmatprep.subr.bf16.mxu0 %v1271
        %1737 = vmatpush1.bf16.msra.mxu0 %v1270
        %1738 = vmatprep.subr.bf16.mxu0 %v1269
        %1739 = vmatpush1.bf16.msra.mxu0 %v1268
        %1740 = vmatprep.subr.bf16.mxu0 %v1267
        %1741 = vmatpush1.bf16.msra.mxu0 %v1266
        %1742 = vmatprep.subr.bf16.mxu0 %v1297
        %1743 = vmatpush2.bf16.msra.mxu0 %v1296
        %1744 = vmatprep.subr.bf16.mxu0 %v1295
        %1745 = vmatpush2.bf16.msra.mxu0 %v1294
        %1746 = vmatprep.subr.bf16.mxu0 %v1293
        %1747 = vmatpush2.bf16.msra.mxu0 %v1292
        %1748 = vmatprep.subr.bf16.mxu0 %v1291
        %1749 = vmatpush2.bf16.msra.mxu0 %v1290
        %1750 = vmatprep.subr.bf16.mxu0 %v1289
        %1751 = vmatpush2.bf16.msra.mxu0 %v1288
        %1752 = vmatprep.subr.bf16.mxu0 %v1287
        %1753 = vmatpush2.bf16.msra.mxu0 %v1286
        %1754 = vmatprep.subr.bf16.mxu0 %v1285
        %1755 = vmatpush2.bf16.msra.mxu0 %v1284
        %1756 = vmatprep.subr.bf16.mxu0 %v1283
        %1757 = vmatpush2.bf16.msra.mxu0 %v1282
        %1758 = vmatprep.mubr.bf16.mxu0 %v595
        %1759 = vmatmul.mubr.bf16.gmra.mxu0 %v594
        %v1760 = vpop.f32.mrf.mxu0
        %v1761 = vadd.f32 %v1670, %v1760
        %v1762 = vpop.f32.mrf.mxu0
        %v1763 = vadd.f32 %v1672, %v1762
        %v1764 = vpop.f32.mrf.mxu0
        %v1765 = vadd.f32 %v1674, %v1764
        %v1766 = vpop.f32.mrf.mxu0
        %v1767 = vadd.f32 %v1676, %v1766
        %1768 = vmatprep.mubr.bf16.mxu0 %v604
        %1769 = vmatmul.mubr.bf16.gmra.mxu0 %v603
        %v1770 = vpop.f32.mrf.mxu0
        %v1771 = vadd.f32 %v1680, %v1770
        %v1772 = vpop.f32.mrf.mxu0
        %v1773 = vadd.f32 %v1682, %v1772
        %v1774 = vpop.f32.mrf.mxu0
        %v1775 = vadd.f32 %v1684, %v1774
        %v1776 = vpop.f32.mrf.mxu0
        %v1777 = vadd.f32 %v1686, %v1776
        %1778 = vmatprep.mubr.bf16.mxu0 %v613
        %1779 = vmatmul.mubr.bf16.gmra.mxu0 %v612
        %v1780 = vpop.f32.mrf.mxu0
        %v1781 = vadd.f32 %v1690, %v1780
        %v1782 = vpop.f32.mrf.mxu0
        %v1783 = vadd.f32 %v1692, %v1782
        %v1784 = vpop.f32.mrf.mxu0
        %v1785 = vadd.f32 %v1694, %v1784
        %v1786 = vpop.f32.mrf.mxu0
        %v1787 = vadd.f32 %v1696, %v1786
        %1788 = vmatprep.mubr.bf16.mxu0 %v622
        %1789 = vmatmul.mubr.bf16.gmra.mxu0 %v621
        %v1790 = vpop.f32.mrf.mxu0
        %v1791 = vadd.f32 %v1700, %v1790
        %v1792 = vpop.f32.mrf.mxu0
        %v1793 = vadd.f32 %v1702, %v1792
        %v1794 = vpop.f32.mrf.mxu0
        %v1795 = vadd.f32 %v1704, %v1794
        %v1796 = vpop.f32.mrf.mxu0
        %v1797 = vadd.f32 %v1706, %v1796
        %1798 = vmatprep.mubr.bf16.mxu0 %v631
        %1799 = vmatmul.mubr.bf16.gmra.mxu0 %v630
        %v1800 = vpop.f32.mrf.mxu0
        %v1801 = vadd.f32 %v1710, %v1800
        %v1802 = vpop.f32.mrf.mxu0
        %v1803 = vadd.f32 %v1712, %v1802
        %v1804 = vpop.f32.mrf.mxu0
        %v1805 = vadd.f32 %v1714, %v1804
        %v1806 = vpop.f32.mrf.mxu0
        %v1807 = vadd.f32 %v1716, %v1806
        %1808 = vmatprep.mubr.bf16.mxu0 %v640
        %1809 = vmatmul.mubr.bf16.gmra.mxu0 %v639
        %v1810 = vpop.f32.mrf.mxu0
        %v1811 = vadd.f32 %v1720, %v1810
        %v1812 = vpop.f32.mrf.mxu0
        %v1813 = vadd.f32 %v1722, %v1812
        %v1814 = vpop.f32.mrf.mxu0
        %v1815 = vpop.f32.mrf.mxu0
        %1816 = vdwg.mxu0
        %1817 = vmatprep.subr.bf16.mxu0 0
        %1818 = vmatpush1.bf16.msra.mxu0 0
        %1819 = vmatprep.subr.bf16.mxu0 0
        %1820 = vmatpush1.bf16.msra.mxu0 0
        %1821 = vmatprep.subr.bf16.mxu0 0
        %1822 = vmatpush1.bf16.msra.mxu0 0
        %1823 = vmatprep.subr.bf16.mxu0 0
        %1824 = vmatpush1.bf16.msra.mxu0 0
        %1825 = vmatprep.subr.bf16.mxu0 0
        %1826 = vmatpush1.bf16.msra.mxu0 0
        %1827 = vmatprep.subr.bf16.mxu0 0
        %1828 = vmatpush1.bf16.msra.mxu0 0
        %1829 = vmatprep.subr.bf16.mxu0 %v1301
        %1830 = vmatpush1.bf16.msra.mxu0 %v1300
        %1831 = vmatprep.subr.bf16.mxu0 %v1299
        %1832 = vmatpush1.bf16.msra.mxu0 %v1298
        %1833 = vmatprep.subr.bf16.mxu0 0
        %1834 = vmatpush2.bf16.msra.mxu0 0
        %1835 = vmatprep.subr.bf16.mxu0 0
        %1836 = vmatpush2.bf16.msra.mxu0 0
        %1837 = vmatprep.subr.bf16.mxu0 0
        %1838 = vmatpush2.bf16.msra.mxu0 0
        %1839 = vmatprep.subr.bf16.mxu0 0
        %1840 = vmatpush2.bf16.msra.mxu0 0
        %1841 = vmatprep.subr.bf16.mxu0 0
        %1842 = vmatpush2.bf16.msra.mxu0 0
        %1843 = vmatprep.subr.bf16.mxu0 0
        %1844 = vmatpush2.bf16.msra.mxu0 0
        %1845 = vmatprep.subr.bf16.mxu0 0
        %1846 = vmatpush2.bf16.msra.mxu0 0
        %1847 = vmatprep.subr.bf16.mxu0 0
        %1848 = vmatpush2.bf16.msra.mxu0 0
        %1849 = vmatprep.mubr.bf16.mxu0 0
        %1850 = vmatmul.mubr.bf16.gmra.mxu0 %v1436
        %v1851 = vpop.f32.mrf.mxu0
        %v1852 = vadd.f32 %v1761, %v1851
        %v1853 = vpop.f32.mrf.mxu0
        %v1854 = vadd.f32 %v1763, %v1853
        %v1855 = vpop.f32.mrf.mxu0
        %v1856 = vadd.f32 %v1765, %v1855
        %v1857 = vpop.f32.mrf.mxu0
        %v1858 = vadd.f32 %v1767, %v1857
        %1859 = vmatprep.mubr.bf16.mxu0 0
        %1860 = vmatmul.mubr.bf16.gmra.mxu0 %v1439
        %v1861 = vpop.f32.mrf.mxu0
        %v1862 = vadd.f32 %v1771, %v1861
        %v1863 = vpop.f32.mrf.mxu0
        %v1864 = vadd.f32 %v1773, %v1863
        %v1865 = vpop.f32.mrf.mxu0
        %v1866 = vadd.f32 %v1775, %v1865
        %v1867 = vpop.f32.mrf.mxu0
        %v1868 = vadd.f32 %v1777, %v1867
        %1869 = vmatprep.mubr.bf16.mxu0 0
        %1870 = vmatmul.mubr.bf16.gmra.mxu0 %v1442
        %v1871 = vpop.f32.mrf.mxu0
        %v1872 = vadd.f32 %v1781, %v1871
        %v1873 = vpop.f32.mrf.mxu0
        %v1874 = vadd.f32 %v1783, %v1873
        %v1875 = vpop.f32.mrf.mxu0
        %v1876 = vadd.f32 %v1785, %v1875
        %v1877 = vpop.f32.mrf.mxu0
        %v1878 = vadd.f32 %v1787, %v1877
        %1879 = vmatprep.mubr.bf16.mxu0 0
        %1880 = vmatmul.mubr.bf16.gmra.mxu0 %v1445
        %v1881 = vpop.f32.mrf.mxu0
        %v1882 = vadd.f32 %v1791, %v1881
        %v1883 = vpop.f32.mrf.mxu0
        %v1884 = vadd.f32 %v1793, %v1883
        %v1885 = vpop.f32.mrf.mxu0
        %v1886 = vadd.f32 %v1795, %v1885
        %v1887 = vpop.f32.mrf.mxu0
        %v1888 = vadd.f32 %v1797, %v1887
        %1889 = vmatprep.mubr.bf16.mxu0 0
        %1890 = vmatmul.mubr.bf16.gmra.mxu0 %v1448
        %v1891 = vpop.f32.mrf.mxu0
        %v1892 = vadd.f32 %v1801, %v1891
        %v1893 = vpop.f32.mrf.mxu0
        %v1894 = vadd.f32 %v1803, %v1893
        %v1895 = vpop.f32.mrf.mxu0
        %v1896 = vadd.f32 %v1805, %v1895
        %v1897 = vpop.f32.mrf.mxu0
        %v1898 = vadd.f32 %v1807, %v1897
        %1899 = vmatprep.mubr.bf16.mxu0 0
        %1900 = vmatmul.mubr.bf16.gmra.mxu0 %v1451
        %v1901 = vpop.f32.mrf.mxu0
        %v1902 = vadd.f32 %v1811, %v1901
        %v1903 = vpop.f32.mrf.mxu0
        %v1904 = vadd.f32 %v1813, %v1903
        %v1905 = vpop.f32.mrf.mxu0
        %v1906 = vpop.f32.mrf.mxu0
        %1907 = vdwg.mxu0
        %vm1908 = vcmask 556032
        %v1909 = vsel %vm1908, %v1854, 0.0
        %v1910 = vadd.f32 %v1852, %v1909
        %1911 = vadd.xlane.f32.xlu0 %v1910
        %v1912 = vpop.xlane.xlu0 %1911
        %v1913 = vsel %vm1908, %v1858, 0.0
        %v1914 = vadd.f32 %v1856, %v1913
        %1915 = vadd.xlane.f32.xlu0 %v1914
        %v1916 = vpop.xlane.xlu0 %1915
        %v1917 = vsel %vm1908, %v1864, 0.0
        %v1918 = vadd.f32 %v1862, %v1917
        %1919 = vadd.xlane.f32.xlu0 %v1918
        %v1920 = vpop.xlane.xlu0 %1919
        %v1921 = vsel %vm1908, %v1868, 0.0
        %v1922 = vadd.f32 %v1866, %v1921
        %1923 = vadd.xlane.f32.xlu0 %v1922
        %v1924 = vpop.xlane.xlu0 %1923
        %v1925 = vsel %vm1908, %v1874, 0.0
        %v1926 = vadd.f32 %v1872, %v1925
        %1927 = vadd.xlane.f32.xlu0 %v1926
        %v1928 = vpop.xlane.xlu0 %1927
        %v1929 = vsel %vm1908, %v1878, 0.0
        %v1930 = vadd.f32 %v1876, %v1929
        %1931 = vadd.xlane.f32.xlu0 %v1930
        %v1932 = vpop.xlane.xlu0 %1931
        %v1933 = vsel %vm1908, %v1884, 0.0
        %v1934 = vadd.f32 %v1882, %v1933
        %1935 = vadd.xlane.f32.xlu0 %v1934
        %v1936 = vpop.xlane.xlu0 %1935
        %v1937 = vsel %vm1908, %v1888, 0.0
        %v1938 = vadd.f32 %v1886, %v1937
        %1939 = vadd.xlane.f32.xlu0 %v1938
        %v1940 = vpop.xlane.xlu0 %1939
        %v1941 = vsel %vm1908, %v1894, 0.0
        %v1942 = vadd.f32 %v1892, %v1941
        %1943 = vadd.xlane.f32.xlu0 %v1942
        %v1944 = vpop.xlane.xlu0 %1943
        %v1945 = vsel %vm1908, %v1898, 0.0
        %v1946 = vadd.f32 %v1896, %v1945
        %1947 = vadd.xlane.f32.xlu0 %v1946
        %v1948 = vpop.xlane.xlu0 %1947
        %v1949 = vsel %vm1908, %v1904, 0.0
        %v1950 = vadd.f32 %v1902, %v1949
        %1951 = vadd.xlane.f32.xlu0 %v1950
        %v1952 = vpop.xlane.xlu0 %1951
        %v1953 = vmul.f32 %v1912, 0.0051020407
        %v1954 = vmul.f32 %v1916, 0.0051020407
        %v1955 = vmul.f32 %v1920, 0.0051020407
        %v1956 = vmul.f32 %v1924, 0.0051020407
        %v1957 = vmul.f32 %v1928, 0.0051020407
        %v1958 = vmul.f32 %v1932, 0.0051020407
        %v1959 = vmul.f32 %v1936, 0.0051020407
        %v1960 = vmul.f32 %v1940, 0.0051020407
        %v1961 = vmul.f32 %v1944, 0.0051020407
        %v1962 = vmul.f32 %v1948, 0.0051020407
        %v1963 = vmul.f32 %v1952, 0.0051020407
        %v1964 = vsub.f32 %v1852, %v1953
        %v1965 = vsub.f32 %v1854, %v1953
        %v1966 = vsub.f32 %v1856, %v1954
        %v1967 = vsub.f32 %v1858, %v1954
        %v1968 = vsub.f32 %v1862, %v1955
        %v1969 = vsub.f32 %v1864, %v1955
        %v1970 = vsub.f32 %v1866, %v1956
        %v1971 = vsub.f32 %v1868, %v1956
        %v1972 = vsub.f32 %v1872, %v1957
        %v1973 = vsub.f32 %v1874, %v1957
        %v1974 = vsub.f32 %v1876, %v1958
        %v1975 = vsub.f32 %v1878, %v1958
        %v1976 = vsub.f32 %v1882, %v1959
        %v1977 = vsub.f32 %v1884, %v1959
        %v1978 = vsub.f32 %v1886, %v1960
        %v1979 = vsub.f32 %v1888, %v1960
        %v1980 = vsub.f32 %v1892, %v1961
        %v1981 = vsub.f32 %v1894, %v1961
        %v1982 = vsub.f32 %v1896, %v1962
        %v1983 = vsub.f32 %v1898, %v1962
        %v1984 = vsub.f32 %v1902, %v1963
        %v1985 = vsub.f32 %v1904, %v1963
        %v1986 = vmul.f32 %v1964, %v1964
        %v1987 = vmul.f32 %v1965, %v1965
        %v1988 = vmul.f32 %v1966, %v1966
        %v1989 = vmul.f32 %v1967, %v1967
        %v1990 = vmul.f32 %v1968, %v1968
        %v1991 = vmul.f32 %v1969, %v1969
        %v1992 = vmul.f32 %v1970, %v1970
        %v1993 = vmul.f32 %v1971, %v1971
        %v1994 = vmul.f32 %v1972, %v1972
        %v1995 = vmul.f32 %v1973, %v1973
        %v1996 = vmul.f32 %v1974, %v1974
        %v1997 = vmul.f32 %v1975, %v1975
        %v1998 = vmul.f32 %v1976, %v1976
        %v1999 = vmul.f32 %v1977, %v1977
        %v2000 = vmul.f32 %v1978, %v1978
        %v2001 = vmul.f32 %v1979, %v1979
        %v2002 = vmul.f32 %v1980, %v1980
        %v2003 = vmul.f32 %v1981, %v1981
        %v2004 = vmul.f32 %v1982, %v1982
        %v2005 = vmul.f32 %v1983, %v1983
        %v2006 = vmul.f32 %v1984, %v1984
        %v2007 = vmul.f32 %v1985, %v1985
        %v2008 = vsel %vm1908, %v1987, 0.0
        %v2009 = vadd.f32 %v1986, %v2008
        %2010 = vadd.xlane.f32.xlu0 %v2009
        %v2011 = vpop.xlane.xlu0 %2010
        %v2012 = vsel %vm1908, %v1989, 0.0
        %v2013 = vadd.f32 %v1988, %v2012
        %2014 = vadd.xlane.f32.xlu0 %v2013
        %v2015 = vpop.xlane.xlu0 %2014
        %v2016 = vsel %vm1908, %v1991, 0.0
        %v2017 = vadd.f32 %v1990, %v2016
        %2018 = vadd.xlane.f32.xlu0 %v2017
        %v2019 = vpop.xlane.xlu0 %2018
        %v2020 = vsel %vm1908, %v1993, 0.0
        %v2021 = vadd.f32 %v1992, %v2020
        %2022 = vadd.xlane.f32.xlu0 %v2021
        %v2023 = vpop.xlane.xlu0 %2022
        %v2024 = vsel %vm1908, %v1995, 0.0
        %v2025 = vadd.f32 %v1994, %v2024
        %2026 = vadd.xlane.f32.xlu0 %v2025
        %v2027 = vpop.xlane.xlu0 %2026
        %v2028 = vsel %vm1908, %v1997, 0.0
        %v2029 = vadd.f32 %v1996, %v2028
        %2030 = vadd.xlane.f32.xlu0 %v2029
        %v2031 = vpop.xlane.xlu0 %2030
        %v2032 = vsel %vm1908, %v1999, 0.0
        %v2033 = vadd.f32 %v1998, %v2032
        %2034 = vadd.xlane.f32.xlu0 %v2033
        %v2035 = vpop.xlane.xlu0 %2034
        %v2036 = vsel %vm1908, %v2001, 0.0
        %v2037 = vadd.f32 %v2000, %v2036
        %2038 = vadd.xlane.f32.xlu0 %v2037
        %v2039 = vpop.xlane.xlu0 %2038
        %v2040 = vsel %vm1908, %v2003, 0.0
        %v2041 = vadd.f32 %v2002, %v2040
        %2042 = vadd.xlane.f32.xlu0 %v2041
        %v2043 = vpop.xlane.xlu0 %2042
        %v2044 = vsel %vm1908, %v2005, 0.0
        %v2045 = vadd.f32 %v2004, %v2044
        %2046 = vadd.xlane.f32.xlu0 %v2045
        %v2047 = vpop.xlane.xlu0 %2046
        %v2048 = vsel %vm1908, %v2007, 0.0
        %v2049 = vadd.f32 %v2006, %v2048
        %2050 = vadd.xlane.f32.xlu0 %v2049
        %v2051 = vpop.xlane.xlu0 %2050
        %v2052 = vmul.f32 %v2011, 0.0051020407
        %v2053 = vmul.f32 %v2015, 0.0051020407
        %v2054 = vmul.f32 %v2019, 0.0051020407
        %v2055 = vmul.f32 %v2023, 0.0051020407
        %v2056 = vmul.f32 %v2027, 0.0051020407
        %v2057 = vmul.f32 %v2031, 0.0051020407
        %v2058 = vmul.f32 %v2035, 0.0051020407
        %v2059 = vmul.f32 %v2039, 0.0051020407
        %v2060 = vmul.f32 %v2043, 0.0051020407
        %v2061 = vmul.f32 %v2047, 0.0051020407
        %v2062 = vmul.f32 %v2051, 0.0051020407
        %v2063 = vadd.f32 %v2052, 0.001
        %v2064 = vadd.f32 %v2053, 0.001
        %v2065 = vadd.f32 %v2054, 0.001
        %v2066 = vadd.f32 %v2055, 0.001
        %v2067 = vadd.f32 %v2056, 0.001
        %v2068 = vadd.f32 %v2057, 0.001
        %v2069 = vadd.f32 %v2058, 0.001
        %v2070 = vadd.f32 %v2059, 0.001
        %v2071 = vadd.f32 %v2060, 0.001
        %v2072 = vadd.f32 %v2061, 0.001
        %v2073 = vadd.f32 %v2062, 0.001
        %v2074 = vrsqrt.pop %v2063
        %v2075 = vrsqrt.pop %v2064
        %v2076 = vrsqrt.pop %v2065
        %v2077 = vrsqrt.pop %v2066
        %v2078 = vrsqrt.pop %v2067
        %v2079 = vrsqrt.pop %v2068
        %v2080 = vrsqrt.pop %v2069
        %v2081 = vrsqrt.pop %v2070
        %v2082 = vrsqrt.pop %v2071
        %v2083 = vrsqrt.pop %v2072
        %v2084 = vrsqrt.pop %v2073
        %v2085 = vld [vmem:[%s264] sm:$0xff]
        %v2086 = vld [vmem:[%s264 + $0x8] sm:$0xff]
        %v2087 = vld [vmem:[%s264 + $0x10] sm:$0xff]
        %v2088 = vld [vmem:[%s264 + $0x18] sm:$0xff]
        %v2089 = vld [vmem:[%s264 + $0x20] sm:$0xff]
        %v2090 = vld [vmem:[%s264 + $0x28] sm:$0xff]
        %v2091 = vld [vmem:[%s264 + $0x30] sm:$0xff]
        %v2092 = vld [vmem:[%s264 + $0x38] sm:$0xff]
        %v2093 = vld [vmem:[%s264 + $0x40] sm:$0xff]
        %v2094 = vld [vmem:[%s264 + $0x48] sm:$0xff]
        %v2095 = vld [vmem:[%s264 + $0x50] sm:$0xff]
        %v2096 = vmul.f32 %v2085, %v2074
        %v2097 = vmul.f32 %v2086, %v2075
        %v2098 = vmul.f32 %v2087, %v2076
        %v2099 = vmul.f32 %v2088, %v2077
        %v2100 = vmul.f32 %v2089, %v2078
        %v2101 = vmul.f32 %v2090, %v2079
        %v2102 = vmul.f32 %v2091, %v2080
        %v2103 = vmul.f32 %v2092, %v2081
        %v2104 = vmul.f32 %v2093, %v2082
        %v2105 = vmul.f32 %v2094, %v2083
        %v2106 = vmul.f32 %v2095, %v2084
        %v2107 = vld [vmem:[%s270] sm:$0xff]
        %v2108 = vld [vmem:[%s270 + $0x8] sm:$0xff]
        %v2109 = vld [vmem:[%s270 + $0x10] sm:$0xff]
        %v2110 = vld [vmem:[%s270 + $0x18] sm:$0xff]
        %v2111 = vld [vmem:[%s270 + $0x20] sm:$0xff]
        %v2112 = vld [vmem:[%s270 + $0x28] sm:$0xff]
        %v2113 = vld [vmem:[%s270 + $0x30] sm:$0xff]
        %v2114 = vld [vmem:[%s270 + $0x38] sm:$0xff]
        %v2115 = vld [vmem:[%s270 + $0x40] sm:$0xff]
        %v2116 = vld [vmem:[%s270 + $0x48] sm:$0xff]
        %v2117 = vld [vmem:[%s270 + $0x50] sm:$0xff]
        %v2118 = vmul.f32 %v1953, %v2096
        %v2119 = vmul.f32 %v1954, %v2097
        %v2120 = vmul.f32 %v1955, %v2098
        %v2121 = vmul.f32 %v1956, %v2099
        %v2122 = vmul.f32 %v1957, %v2100
        %v2123 = vmul.f32 %v1958, %v2101
        %v2124 = vmul.f32 %v1959, %v2102
        %v2125 = vmul.f32 %v1960, %v2103
        %v2126 = vmul.f32 %v1961, %v2104
        %v2127 = vmul.f32 %v1962, %v2105
        %v2128 = vmul.f32 %v1963, %v2106
        %v2129 = vsub.f32 %v2107, %v2118
        %v2130 = vsub.f32 %v2108, %v2119
        %v2131 = vsub.f32 %v2109, %v2120
        %v2132 = vsub.f32 %v2110, %v2121
        %v2133 = vsub.f32 %v2111, %v2122
        %v2134 = vsub.f32 %v2112, %v2123
        %v2135 = vsub.f32 %v2113, %v2124
        %v2136 = vsub.f32 %v2114, %v2125
        %v2137 = vsub.f32 %v2115, %v2126
        %v2138 = vsub.f32 %v2116, %v2127
        %v2139 = vsub.f32 %v2117, %v2128
        %2141 = vset.pattern.permute.xlu0 0
        %2142 = vperm.xlu0 %2141, %v2096
        %v2143 = vpop.permute.xlu0 %2142
        %2146 = vset.pattern.permute.xlu0 0
        %2147 = vperm.xlu0 %2146, %v2097
        %v2148 = vpop.permute.xlu0 %2147
        %2151 = vset.pattern.permute.xlu0 0
        %2152 = vperm.xlu0 %2151, %v2098
        %v2153 = vpop.permute.xlu0 %2152
        %2156 = vset.pattern.permute.xlu0 0
        %2157 = vperm.xlu0 %2156, %v2099
        %v2158 = vpop.permute.xlu0 %2157
        %2161 = vset.pattern.permute.xlu0 0
        %2162 = vperm.xlu0 %2161, %v2100
        %v2163 = vpop.permute.xlu0 %2162
        %2166 = vset.pattern.permute.xlu0 0
        %2167 = vperm.xlu0 %2166, %v2101
        %v2168 = vpop.permute.xlu0 %2167
        %2171 = vset.pattern.permute.xlu0 0
        %2172 = vperm.xlu0 %2171, %v2102
        %v2173 = vpop.permute.xlu0 %2172
        %2176 = vset.pattern.permute.xlu0 0
        %2177 = vperm.xlu0 %2176, %v2103
        %v2178 = vpop.permute.xlu0 %2177
        %2181 = vset.pattern.permute.xlu0 0
        %2182 = vperm.xlu0 %2181, %v2104
        %v2183 = vpop.permute.xlu0 %2182
        %2186 = vset.pattern.permute.xlu0 0
        %2187 = vperm.xlu0 %2186, %v2105
        %v2188 = vpop.permute.xlu0 %2187
        %2191 = vset.pattern.permute.xlu0 0
        %2192 = vperm.xlu0 %2191, %v2106
        %v2193 = vpop.permute.xlu0 %2192
        %v2195 = vmul.f32 %v1852, %v2143
        %v2196 = vmul.f32 %v1854, %v2143
        %v2197 = vmul.f32 %v1856, %v2148
        %v2198 = vmul.f32 %v1858, %v2148
        %v2199 = vmul.f32 %v1862, %v2153
        %v2200 = vmul.f32 %v1864, %v2153
        %v2201 = vmul.f32 %v1866, %v2158
        %v2202 = vmul.f32 %v1868, %v2158
        %v2203 = vmul.f32 %v1872, %v2163
        %v2204 = vmul.f32 %v1874, %v2163
        %v2205 = vmul.f32 %v1876, %v2168
        %v2206 = vmul.f32 %v1878, %v2168
        %v2207 = vmul.f32 %v1882, %v2173
        %v2208 = vmul.f32 %v1884, %v2173
        %v2209 = vmul.f32 %v1886, %v2178
        %v2210 = vmul.f32 %v1888, %v2178
        %v2211 = vmul.f32 %v1892, %v2183
        %v2212 = vmul.f32 %v1894, %v2183
        %v2213 = vmul.f32 %v1896, %v2188
        %v2214 = vmul.f32 %v1898, %v2188
        %v2215 = vmul.f32 %v1902, %v2193
        %v2216 = vmul.f32 %v1904, %v2193
        %2218 = vset.pattern.permute.xlu0 0
        %2219 = vperm.xlu0 %2218, %v2129
        %v2220 = vpop.permute.xlu0 %2219
        %2223 = vset.pattern.permute.xlu0 0
        %2224 = vperm.xlu0 %2223, %v2130
        %v2225 = vpop.permute.xlu0 %2224
        %2228 = vset.pattern.permute.xlu0 0
        %2229 = vperm.xlu0 %2228, %v2131
        %v2230 = vpop.permute.xlu0 %2229
        %2233 = vset.pattern.permute.xlu0 0
        %2234 = vperm.xlu0 %2233, %v2132
        %v2235 = vpop.permute.xlu0 %2234
        %2238 = vset.pattern.permute.xlu0 0
        %2239 = vperm.xlu0 %2238, %v2133
        %v2240 = vpop.permute.xlu0 %2239
        %2243 = vset.pattern.permute.xlu0 0
        %2244 = vperm.xlu0 %2243, %v2134
        %v2245 = vpop.permute.xlu0 %2244
        %2248 = vset.pattern.permute.xlu0 0
        %2249 = vperm.xlu0 %2248, %v2135
        %v2250 = vpop.permute.xlu0 %2249
        %2253 = vset.pattern.permute.xlu0 0
        %2254 = vperm.xlu0 %2253, %v2136
        %v2255 = vpop.permute.xlu0 %2254
        %2258 = vset.pattern.permute.xlu0 0
        %2259 = vperm.xlu0 %2258, %v2137
        %v2260 = vpop.permute.xlu0 %2259
        %2263 = vset.pattern.permute.xlu0 0
        %2264 = vperm.xlu0 %2263, %v2138
        %v2265 = vpop.permute.xlu0 %2264
        %2268 = vset.pattern.permute.xlu0 0
        %2269 = vperm.xlu0 %2268, %v2139
        %v2270 = vpop.permute.xlu0 %2269
        %v2272 = vadd.f32 %v2195, %v2220
        %v2273 = vadd.f32 %v2196, %v2220
        %v2274 = vadd.f32 %v2197, %v2225
        %v2275 = vadd.f32 %v2198, %v2225
        %v2276 = vadd.f32 %v2199, %v2230
        %v2277 = vadd.f32 %v2200, %v2230
        %v2278 = vadd.f32 %v2201, %v2235
        %v2279 = vadd.f32 %v2202, %v2235
        %v2280 = vadd.f32 %v2203, %v2240
        %v2281 = vadd.f32 %v2204, %v2240
        %v2282 = vadd.f32 %v2205, %v2245
        %v2283 = vadd.f32 %v2206, %v2245
        %v2284 = vadd.f32 %v2207, %v2250
        %v2285 = vadd.f32 %v2208, %v2250
        %v2286 = vadd.f32 %v2209, %v2255
        %v2287 = vadd.f32 %v2210, %v2255
        %v2288 = vadd.f32 %v2211, %v2260
        %v2289 = vadd.f32 %v2212, %v2260
        %v2290 = vadd.f32 %v2213, %v2265
        %v2291 = vadd.f32 %v2214, %v2265
        %v2292 = vadd.f32 %v2215, %v2270
        %v2293 = vadd.f32 %v2216, %v2270
        %2294 = vst [vmem:[%s252] sm:$0xff] %v2272
        %2295 = vst.msk [vmem:[%s252 + $0x8] sm:$0xff] %vm1908, %v2273
        %2296 = vst [vmem:[%s252 + $0x10] sm:$0xff] %v2274
        %2297 = vst.msk [vmem:[%s252 + $0x18] sm:$0xff] %vm1908, %v2275
        %2298 = vst [vmem:[%s252 + $0x20] sm:$0xff] %v2276
        %2299 = vst.msk [vmem:[%s252 + $0x28] sm:$0xff] %vm1908, %v2277
        %2300 = vst [vmem:[%s252 + $0x30] sm:$0xff] %v2278
        %2301 = vst.msk [vmem:[%s252 + $0x38] sm:$0xff] %vm1908, %v2279
        %2302 = vst [vmem:[%s252 + $0x40] sm:$0xff] %v2280
        %2303 = vst.msk [vmem:[%s252 + $0x48] sm:$0xff] %vm1908, %v2281
        %2304 = vst [vmem:[%s252 + $0x50] sm:$0xff] %v2282
        %2305 = vst.msk [vmem:[%s252 + $0x58] sm:$0xff] %vm1908, %v2283
        %2306 = vst [vmem:[%s252 + $0x60] sm:$0xff] %v2284
        %2307 = vst.msk [vmem:[%s252 + $0x68] sm:$0xff] %vm1908, %v2285
        %2308 = vst [vmem:[%s252 + $0x70] sm:$0xff] %v2286
        %2309 = vst.msk [vmem:[%s252 + $0x78] sm:$0xff] %vm1908, %v2287
        %2310 = vst [vmem:[%s252 + $0x80] sm:$0xff] %v2288
        %2311 = vst.msk [vmem:[%s252 + $0x88] sm:$0xff] %vm1908, %v2289
        %2312 = vst [vmem:[%s252 + $0x90] sm:$0xff] %v2290
        %2313 = vst.msk [vmem:[%s252 + $0x98] sm:$0xff] %vm1908, %v2291
        %2314 = vst [vmem:[%s252 + $0xa0] sm:$0xff] %v2292
        %2315 = vst.msk [vmem:[%s252 + $0xa8] sm:$0xff] %vm1908, %v2293
        %s2316 = sand.u32 %s147, 1
        %s2317 = scalar_lea.sflag [#allocation3], %s2316
        %s2318 = sand.u32 %s147, 1
        %s2319 = smul.addr %s2318, 176
        %s2320 = scalar_lea.vmem [#allocation2], %s2319
        // Predicated region
        $region41: #{tpu_custom_call.1} parent=39 // pred_check
          %p2321 = pneg %p157
        $region42: #{tpu_custom_call.1} parent=39 // pred_check_branch
          %2323 = sbr.rel (%p2321) target = $region44
        $region43: #{tpu_custom_call.1} parent=39 // pred_region
          %s2324 = smul.u32 11, %s19
          %s2326 = ssub.s32 2816, 2816
          %2327 = vsyncadd %s2317, %s2326
          %s2328 = smul.addr %s2324, 2
          %s2329 = smul.addr %s2328, 128
          %s2330 = scalar_lea.hbm %s5, %s2329
          %s2331 = sshll.u32 %s2320, 4
          %s2332 = int_to_ptr.vmem [resolvable:$true] %s2331
          %2337 = dma.vmem_to_hbm [thread:$0]  %s2332, 2816, %s2330, %s2317, 256, 256, 16
        $region44: #{tpu_custom_call.1} parent=39 // pred_fallthru
          _
      $region40: #{tpu_custom_call.1} parent=5 // pred_fallthru
        _
      %p2338 = scmp.le.s32.totalorder 2, %s14
      // Predicated region
      $region45: #{tpu_custom_call.1} parent=5 // pred_check
        %p2339 = pneg %p2338
      $region46: #{tpu_custom_call.1} parent=5 // pred_check_branch
        %2341 = sbr.rel (%p2339) target = $region48
      $region47: #{tpu_custom_call.1} parent=5 // pred_region
        %s2342 = ssub.s32 %s14, 2
        // Predicated region
        $region49: #{tpu_custom_call.1} parent=47 // pred_check
          %p2343 = pneg %p163
        $region50: #{tpu_custom_call.1} parent=47 // pred_check_branch
          %2345 = sbr.rel (%p2343) target = $region52
        $region51: #{tpu_custom_call.1} parent=47 // pred_region
          %s2346 = sand.u32 %s148, 1
          %s2347 = scalar_lea.sflag [#allocation3], %s2346
          %s2348 = sand.u32 %s148, 1
          %s2349 = smul.addr %s2348, 176
          %s2350 = scalar_lea.vmem [#allocation2], %s2349
          %2351 = dma.done %s2347, 2816
        $region52: #{tpu_custom_call.1} parent=47 // pred_fallthru
          _
      $region48: #{tpu_custom_call.1} parent=5 // pred_fallthru
        _
    $region6: #{tpu_custom_call.1} parent=1 // loop_footer
      %s18 = sadd.s32 1, %s14
    $region7: #{tpu_custom_call.1} parent=1 // loop_footer_branch
      %13 = sbr.rel target = $region3
    $region8: #{tpu_custom_call.1} parent=1 // loop_exit
      _
    %2352 = vsyncpa [#allocation3], 1
    %s2353 = scalar_lea.sflag [#allocation3], 1
    %2354 = vsyncpa %s2353, 1

</llo_original>
